<compile_context>
chip_gen: v7x
topology: tpu7x:2x2x1
jax: 0.10.0
libtpu: 0.0.40
codegen_flags: <defaults>
</compile_context>

<pallas_src>
import functools
import jax
import jax.numpy as jnp
from jax.experimental import pallas as pl
from jax.experimental.pallas import tpu as pltpu

_INV_SQRT2 = 0.7071067811865476
_SQRT_2_OVER_PI = 0.7978845608028654


def _layernorm(v, g, b, eps=1e-6):
    # f32 elementwise; rsqrt lowers to the EUP slot. eps matches nn.LayerNorm(dim, eps=1e-6).
    mu = jnp.mean(v, axis=-1, keepdims=True)
    var = jnp.mean((v - mu) ** 2, axis=-1, keepdims=True)
    return (v - mu) * jax.lax.rsqrt(var + eps) * g + b


def _gelu_exact(x):
    # PyTorch nn.GELU() default: exact erf-based GELU (numerical parity).
    return 0.5 * x * (1.0 + jax.lax.erf(x * _INV_SQRT2))


def _gelu_tanh(x):
    # tanh approximation: transcendental goes to the otherwise-idle EUP slot instead of a
    # long VPU erf polynomial. Max abs deviation from erf-GELU ~3e-3.
    return 0.5 * x * (1.0 + jnp.tanh(_SQRT_2_OVER_PI * (x + 0.044715 * x * x * x)))


def _softmax_lastdim(s):
    # max / exp / sum in f32; divide replaced by EUP approx reciprocal (~1e-3 rel error).
    m = jnp.max(s, axis=-1, keepdims=True)
    e = jnp.exp(s - m)
    denom = jnp.sum(e, axis=-1, keepdims=True)
    return e * pl.reciprocal(denom, approx=True)


def block_kernel(x_ref,
                 ln1g_ref, ln1b_ref,
                 wqkv_ref,
                 wproj_ref, bproj_ref,
                 ln2g_ref, ln2b_ref,
                 w1_ref, b1_ref,
                 w2_ref, b2_ref,
                 o_ref,
                 attn_slab,          # VMEM scratch (N, D) bf16
                 *, num_heads: int, approx_gelu: bool):
    x = x_ref[...].astype(jnp.float32)        # (N, D) f32 (batch dim squeezed away)
    D = x.shape[-1]
    hd = D // num_heads
    scale = hd ** (-0.5)

    # ---- Attention branch ----
    xn = _layernorm(x, ln1g_ref[0], ln1b_ref[0])
    # bf16 MXU operands, f32 accumulation.
    qkv = jnp.dot(xn.astype(jnp.bfloat16), wqkv_ref[...],
                  preferred_element_type=jnp.float32)                  # (N, 3D) f32
    # Fold the 1/sqrt(hd) scale into q once (N*D mults) instead of per-head (h*N*N),
    # then cast q/k/v to bf16 once (they are only ever consumed as MXU operands).
    q = (qkv[:, 0:D] * scale).astype(jnp.bfloat16)
    k = qkv[:, D:2 * D].astype(jnp.bfloat16)
    v = qkv[:, 2 * D:3 * D].astype(jnp.bfloat16)

    # rearrange 'b n (qkv h d) -> qkv b h n d': head hh owns columns [hh*hd : (hh+1)*hd].
    # Each head's output is written straight into the VMEM slab (no concatenate).
    # QK^T via dot_general contracting the minor dims -> no kh.T transpose.
    qk_dims = (((1,), (1,)), ((), ()))
    for hh in range(num_heads):
        sl = slice(hh * hd, (hh + 1) * hd)
        qh = q[:, sl]                                                  # (N, hd) bf16
        kh = k[:, sl]                                                  # (N, hd) bf16
        vh = v[:, sl]                                                  # (N, hd) bf16
        dots = jax.lax.dot_general(qh, kh, qk_dims,
                                   preferred_element_type=jnp.float32)  # (N, N) f32
        attn = _softmax_lastdim(dots)                                  # f32
        ho = jnp.dot(attn.astype(jnp.bfloat16), vh,
                     preferred_element_type=jnp.float32)               # (N, hd) f32
        attn_slab[:, sl] = ho.astype(jnp.bfloat16)

    attn_out = jnp.dot(attn_slab[...], wproj_ref[...],
                       preferred_element_type=jnp.float32) + bproj_ref[0]
    x1 = x + attn_out                                                  # first residual (f32)

    # ---- MLP branch ----
    xn2 = _layernorm(x1, ln2g_ref[0], ln2b_ref[0])
    h = jnp.dot(xn2.astype(jnp.bfloat16), w1_ref[...],
                preferred_element_type=jnp.float32) + b1_ref[0]
    h = _gelu_tanh(h) if approx_gelu else _gelu_exact(h)               # f32 elementwise
    mlp_out = jnp.dot(h.astype(jnp.bfloat16), w2_ref[...],
                      preferred_element_type=jnp.float32) + b2_ref[0]

    o_ref[...] = (x1 + mlp_out).astype(o_ref.dtype)                    # second residual


def _pick_vmem_limit_bytes():
    """Generation-aware VMEM budget: ~100 MiB on 128-MiB parts (v5e/v6e), ~56 MiB on 64-MiB/TC parts (v7x)."""
    cap = 64 * 1024 * 1024
    try:
        cap = int(pltpu.get_tpu_info().vmem_capacity_bytes)
    except Exception:
        pass
    return int(min(cap - 8 * 1024 * 1024, 100 * 1024 * 1024))


def vit_block(x, params, num_heads, *, approx_gelu=False):
    B, N, D = x.shape
    H = params["w1"].shape[1]

    def const_spec(shape):
        # Grid-invariant block (same tile for every b): single-buffer it so its VMEM
        # footprint is not doubled; it is only DMA'd once anyway.
        index_map = lambda b, _shape=shape: tuple(0 for _ in _shape)
        try:
            return pl.BlockSpec(shape, index_map, pipeline_mode=pl.Buffered(1))
        except Exception:
            # Fallback for JAX versions without pipeline_mode on BlockSpec.
            return pl.BlockSpec(shape, index_map)

    kernel = functools.partial(block_kernel, num_heads=num_heads, approx_gelu=approx_gelu)

    return pl.pallas_call(
        kernel,
        out_shape=jax.ShapeDtypeStruct((B, N, D), x.dtype),
        grid_spec=pltpu.PrefetchScalarGridSpec(
            num_scalar_prefetch=0,
            grid=(B,),
            in_specs=[
                pl.BlockSpec((pl.Squeezed(), N, D), lambda b: (b, 0, 0)),  # x -> kernel sees (N, D)
                const_spec((1, D)),                               # ln1 gamma (f32)
                const_spec((1, D)),                               # ln1 beta  (f32)
                const_spec((D, 3 * D)),                           # Wqkv (bf16, in x out)
                const_spec((D, D)),                               # Wproj (bf16)
                const_spec((1, D)),                               # bproj (f32)
                const_spec((1, D)),                               # ln2 gamma (f32)
                const_spec((1, D)),                               # ln2 beta  (f32)
                const_spec((D, H)),                               # W1 (bf16)
                const_spec((1, H)),                               # b1 (f32)
                const_spec((H, D)),                               # W2 (bf16)
                const_spec((1, D)),                               # b2 (f32)
            ],
            out_specs=pl.BlockSpec((pl.Squeezed(), N, D), lambda b: (b, 0, 0)),
            scratch_shapes=[pltpu.VMEM((N, D), jnp.bfloat16)],
        ),
        compiler_params=pltpu.CompilerParams(
            dimension_semantics=("parallel",),           # shards over v7x's 2 TCs; neutral on v5e/v6e
            vmem_limit_bytes=_pick_vmem_limit_bytes()),
    )(x,
      params["ln1_g"], params["ln1_b"],
      params["wqkv"],
      params["wproj"], params["bproj"],
      params["ln2_g"], params["ln2_b"],
      params["w1"], params["b1"],
      params["w2"], params["b2"])


def reference_block(x, p, num_heads):
    # Pure-JAX f32 reference (weights cast back from bf16 -> exact same values).
    B, N, D = x.shape
    hd = D // num_heads
    scale = hd ** -0.5
    f32 = lambda a: a.astype(jnp.float32)

    def ln(v, g, b):
        mu = jnp.mean(v, -1, keepdims=True)
        var = jnp.mean((v - mu) ** 2, -1, keepdims=True)
        return (v - mu) / jnp.sqrt(var + 1e-6) * g[0] + b[0]

    xn = ln(x, p["ln1_g"], p["ln1_b"])
    qkv = xn @ f32(p["wqkv"])                                 # (B, N, 3D)
    qkv = qkv.reshape(B, N, 3, num_heads, hd)
    q, k, v = [jnp.transpose(qkv[:, :, i], (0, 2, 1, 3)) for i in range(3)]
    dots = jnp.einsum('bhid,bhjd->bhij', q, k) * scale
    attn = jax.nn.softmax(dots, -1)
    out = jnp.einsum('bhij,bhjd->bhid', attn, v)
    out = jnp.transpose(out, (0, 2, 1, 3)).reshape(B, N, D)
    out = out @ f32(p["wproj"]) + p["bproj"][0]
    x1 = x + out
    xn2 = ln(x1, p["ln2_g"], p["ln2_b"])
    h = xn2 @ f32(p["w1"]) + p["b1"][0]
    h = 0.5 * h * (1.0 + jax.lax.erf(h / jnp.sqrt(2.0)))      # exact GELU (nn.GELU default)
    return x1 + h @ f32(p["w2"]) + p["b2"][0]


if __name__ == "__main__":
    B, N, D = 2, 8, 32
    num_heads = 4
    mlp_ratio = 2.0
    H = int(D * mlp_ratio)

    key = jax.random.PRNGKey(0)
    ks = jax.random.split(key, 8)

    bf16 = jnp.bfloat16
    params = {
        # LayerNorm params and biases stay f32; matmul weights stored bf16 (MXU-native).
        "ln1_g": jnp.ones((1, D), jnp.float32),
        "ln1_b": jnp.zeros((1, D), jnp.float32),
        "wqkv": (0.05 * jax.random.normal(ks[0], (D, 3 * D), jnp.float32)).astype(bf16),  # qkv_bias=False
        "wproj": (0.05 * jax.random.normal(ks[1], (D, D), jnp.float32)).astype(bf16),
        "bproj": 0.05 * jax.random.normal(ks[2], (1, D), jnp.float32),
        "ln2_g": jnp.ones((1, D), jnp.float32),
        "ln2_b": jnp.zeros((1, D), jnp.float32),
        "w1": (0.05 * jax.random.normal(ks[3], (D, H), jnp.float32)).astype(bf16),
        "b1": 0.05 * jax.random.normal(ks[4], (1, H), jnp.float32),
        "w2": (0.05 * jax.random.normal(ks[5], (H, D), jnp.float32)).astype(bf16),
        "b2": 0.05 * jax.random.normal(ks[6], (1, D), jnp.float32),
    }

    x = jax.random.normal(ks[7], (B, N, D), jnp.float32)

    out = vit_block(x, params, num_heads)       # default: exact erf GELU for PyTorch parity
    out = jax.block_until_ready(out)

    ref = reference_block(x, params, num_heads)
    assert jnp.allclose(out, ref, atol=3e-2, rtol=3e-2), (
        f"max err {jnp.max(jnp.abs(out - ref))}")

    print("KERNEL_OK")
</pallas_src>

<mosaic_0001>
module attributes {stable_mosaic.version = 11 : i64} {
  func.func @block_kernel(%arg0: i32, %arg1: memref<1x8x32xf32, #tpu.memory_space<vmem>>, %arg2: memref<1x32xf32, #tpu.memory_space<vmem>>, %arg3: memref<1x32xf32, #tpu.memory_space<vmem>>, %arg4: memref<32x96xbf16, #tpu.memory_space<vmem>>, %arg5: memref<32x32xbf16, #tpu.memory_space<vmem>>, %arg6: memref<1x32xf32, #tpu.memory_space<vmem>>, %arg7: memref<1x32xf32, #tpu.memory_space<vmem>>, %arg8: memref<1x32xf32, #tpu.memory_space<vmem>>, %arg9: memref<32x64xbf16, #tpu.memory_space<vmem>>, %arg10: memref<1x64xf32, #tpu.memory_space<vmem>>, %arg11: memref<64x32xbf16, #tpu.memory_space<vmem>>, %arg12: memref<1x32xf32, #tpu.memory_space<vmem>>, %arg13: memref<1x8x32xf32, #tpu.memory_space<vmem>>, %arg14: memref<8x32xbf16, #tpu.memory_space<vmem>>) attributes {dimension_semantics = [#tpu.dimension_semantics<parallel>], iteration_bounds = array<i64: 2>, scalar_prefetch = 0 : i64, scratch_operands = 1 : i64, tpu.core_type = #tpu.core_type<tc>, window_params = [{transform_indices = @transform_0, window_bounds = array<i64: 1, 8, 32>}, {pipeline_mode = #tpu.pipeline_mode<synchronous>, transform_indices = @transform_1, window_bounds = array<i64: 1, 32>}, {pipeline_mode = #tpu.pipeline_mode<synchronous>, transform_indices = @transform_2, window_bounds = array<i64: 1, 32>}, {pipeline_mode = #tpu.pipeline_mode<synchronous>, transform_indices = @transform_3, window_bounds = array<i64: 32, 96>}, {pipeline_mode = #tpu.pipeline_mode<synchronous>, transform_indices = @transform_4, window_bounds = array<i64: 32, 32>}, {pipeline_mode = #tpu.pipeline_mode<synchronous>, transform_indices = @transform_5, window_bounds = array<i64: 1, 32>}, {pipeline_mode = #tpu.pipeline_mode<synchronous>, transform_indices = @transform_6, window_bounds = array<i64: 1, 32>}, {pipeline_mode = #tpu.pipeline_mode<synchronous>, transform_indices = @transform_7, window_bounds = array<i64: 1, 32>}, {pipeline_mode = #tpu.pipeline_mode<synchronous>, transform_indices = @transform_8, window_bounds = array<i64: 32, 64>}, {pipeline_mode = #tpu.pipeline_mode<synchronous>, transform_indices = @transform_9, window_bounds = array<i64: 1, 64>}, {pipeline_mode = #tpu.pipeline_mode<synchronous>, transform_indices = @transform_10, window_bounds = array<i64: 64, 32>}, {pipeline_mode = #tpu.pipeline_mode<synchronous>, transform_indices = @transform_11, window_bounds = array<i64: 1, 32>}, {transform_indices = @transform_12, window_bounds = array<i64: 1, 8, 32>}]} {
    %c0 = arith.constant 0 : index
    %c0_0 = arith.constant 0 : index
    %c0_1 = arith.constant 0 : index
    %0 = vector.load %arg1[%c0, %c0_0, %c0_1] : memref<1x8x32xf32, #tpu.memory_space<vmem>>, vector<1x8x32xf32>
    %1 = vector.shape_cast %0 : vector<1x8x32xf32> to vector<8x32xf32>
    %c0_2 = arith.constant 0 : index
    %c0_3 = arith.constant 0 : index
    %2 = vector.load %arg2[%c0_2, %c0_3] : memref<1x32xf32, #tpu.memory_space<vmem>>, vector<1x32xf32>
    %3 = vector.shape_cast %2 : vector<1x32xf32> to vector<32xf32>
    %c0_4 = arith.constant 0 : index
    %c0_5 = arith.constant 0 : index
    %4 = vector.load %arg3[%c0_4, %c0_5] : memref<1x32xf32, #tpu.memory_space<vmem>>, vector<1x32xf32>
    %5 = vector.shape_cast %4 : vector<1x32xf32> to vector<32xf32>
    %cst = arith.constant dense<0.000000e+00> : vector<8xf32>
    %6 = vector.multi_reduction <add>, %1, %cst [1] : vector<8x32xf32> to vector<8xf32>
    %7 = vector.shape_cast %6 : vector<8xf32> to vector<8x1xf32>
    %cst_6 = arith.constant 3.200000e+01 : f32
    %8 = vector.broadcast %cst_6 : f32 to vector<8x1xf32>
    %9 = arith.divf %7, %8 : vector<8x1xf32>
    %10 = vector.broadcast %9 : vector<8x1xf32> to vector<8x32xf32>
    %11 = arith.subf %1, %10 : vector<8x32xf32>
    %12 = arith.mulf %11, %11 : vector<8x32xf32>
    %cst_7 = arith.constant dense<0.000000e+00> : vector<8xf32>
    %13 = vector.multi_reduction <add>, %12, %cst_7 [1] : vector<8x32xf32> to vector<8xf32>
    %14 = vector.shape_cast %13 : vector<8xf32> to vector<8x1xf32>
    %cst_8 = arith.constant 3.200000e+01 : f32
    %15 = vector.broadcast %cst_8 : f32 to vector<8x1xf32>
    %16 = arith.divf %14, %15 : vector<8x1xf32>
    %17 = vector.broadcast %9 : vector<8x1xf32> to vector<8x32xf32>
    %18 = arith.subf %1, %17 : vector<8x32xf32>
    %cst_9 = arith.constant 9.99999997E-7 : f32
    %19 = vector.broadcast %cst_9 : f32 to vector<8x1xf32>
    %20 = arith.addf %16, %19 : vector<8x1xf32>
    %21 = math.rsqrt %20 : vector<8x1xf32>
    %22 = vector.broadcast %21 : vector<8x1xf32> to vector<8x32xf32>
    %23 = arith.mulf %18, %22 : vector<8x32xf32>
    %24 = vector.shape_cast %3 : vector<32xf32> to vector<1x32xf32>
    %25 = vector.broadcast %24 : vector<1x32xf32> to vector<8x32xf32>
    %26 = arith.mulf %23, %25 : vector<8x32xf32>
    %27 = vector.shape_cast %5 : vector<32xf32> to vector<1x32xf32>
    %28 = vector.broadcast %27 : vector<1x32xf32> to vector<8x32xf32>
    %29 = arith.addf %26, %28 : vector<8x32xf32>
    %30 = arith.truncf %29 : vector<8x32xf32> to vector<8x32xbf16>
    %c0_10 = arith.constant 0 : index
    %c0_11 = arith.constant 0 : index
    %31 = vector.load %arg4[%c0_10, %c0_11] : memref<32x96xbf16, #tpu.memory_space<vmem>>, vector<32x96xbf16>
    %cst_12 = arith.constant dense<0.000000e+00> : vector<8x96xf32>
    %32 = tpu.matmul %30, %31, %cst_12 {dimension_numbers = #tpu.dot_dimension_numbers<[1], [0], [0], [1], [0, 0, 1, 1], [], []>} : vector<8x32xbf16>, vector<32x96xbf16>, vector<8x96xf32> -> vector<8x96xf32>
    %33 = vector.extract_strided_slice %32 {offsets = [0, 0], sizes = [8, 32], strides = [1, 1]} : vector<8x96xf32> to vector<8x32xf32>
    %cst_13 = arith.constant 0.353553385 : f32
    %34 = vector.broadcast %cst_13 : f32 to vector<8x32xf32>
    %35 = arith.mulf %33, %34 : vector<8x32xf32>
    %36 = arith.truncf %35 : vector<8x32xf32> to vector<8x32xbf16>
    %37 = vector.extract_strided_slice %32 {offsets = [0, 32], sizes = [8, 32], strides = [1, 1]} : vector<8x96xf32> to vector<8x32xf32>
    %38 = arith.truncf %37 : vector<8x32xf32> to vector<8x32xbf16>
    %39 = vector.extract_strided_slice %32 {offsets = [0, 64], sizes = [8, 32], strides = [1, 1]} : vector<8x96xf32> to vector<8x32xf32>
    %40 = arith.truncf %39 : vector<8x32xf32> to vector<8x32xbf16>
    %41 = vector.extract_strided_slice %36 {offsets = [0, 0], sizes = [8, 8], strides = [1, 1]} : vector<8x32xbf16> to vector<8x8xbf16>
    %42 = vector.extract_strided_slice %38 {offsets = [0, 0], sizes = [8, 8], strides = [1, 1]} : vector<8x32xbf16> to vector<8x8xbf16>
    %43 = vector.extract_strided_slice %40 {offsets = [0, 0], sizes = [8, 8], strides = [1, 1]} : vector<8x32xbf16> to vector<8x8xbf16>
    %cst_14 = arith.constant dense<0.000000e+00> : vector<8x8xf32>
    %44 = tpu.matmul %41, %42, %cst_14 {dimension_numbers = #tpu.dot_dimension_numbers<[1], [1], [0], [0], [0, 0, 1, 0], [], []>} : vector<8x8xbf16>, vector<8x8xbf16>, vector<8x8xf32> -> vector<8x8xf32>
    %cst_15 = arith.constant dense<0xFF800000> : vector<8xf32>
    %45 = vector.multi_reduction <maximumf>, %44, %cst_15 [1] : vector<8x8xf32> to vector<8xf32>
    %46 = vector.shape_cast %45 : vector<8xf32> to vector<8x1xf32>
    %47 = vector.broadcast %46 : vector<8x1xf32> to vector<8x8xf32>
    %48 = arith.subf %44, %47 : vector<8x8xf32>
    %49 = math.exp %48 : vector<8x8xf32>
    %cst_16 = arith.constant dense<0.000000e+00> : vector<8xf32>
    %50 = vector.multi_reduction <add>, %49, %cst_16 [1] : vector<8x8xf32> to vector<8xf32>
    %51 = vector.shape_cast %50 : vector<8xf32> to vector<8x1xf32>
    %52 = tpu.reciprocal %51 {approx = true} : vector<8x1xf32> -> vector<8x1xf32>
    %53 = vector.broadcast %52 : vector<8x1xf32> to vector<8x8xf32>
    %54 = arith.mulf %49, %53 : vector<8x8xf32>
    %55 = arith.truncf %54 : vector<8x8xf32> to vector<8x8xbf16>
    %cst_17 = arith.constant dense<0.000000e+00> : vector<8x8xf32>
    %56 = tpu.matmul %55, %43, %cst_17 {dimension_numbers = #tpu.dot_dimension_numbers<[1], [0], [0], [1], [0, 0, 1, 1], [], []>} : vector<8x8xbf16>, vector<8x8xbf16>, vector<8x8xf32> -> vector<8x8xf32>
    %57 = arith.truncf %56 : vector<8x8xf32> to vector<8x8xbf16>
    %c0_18 = arith.constant 0 : index
    %c0_19 = arith.constant 0 : index
    %58 = vector.load %arg14[%c0_18, %c0_19] : memref<8x32xbf16, #tpu.memory_space<vmem>>, vector<8x8xbf16>
    tpu.vector_store %arg14[%c0_18, %c0_19], %57 {strides = array<i32>} : memref<8x32xbf16, #tpu.memory_space<vmem>>, vector<8x8xbf16>,
    %59 = vector.extract_strided_slice %36 {offsets = [0, 8], sizes = [8, 8], strides = [1, 1]} : vector<8x32xbf16> to vector<8x8xbf16>
    %60 = vector.extract_strided_slice %38 {offsets = [0, 8], sizes = [8, 8], strides = [1, 1]} : vector<8x32xbf16> to vector<8x8xbf16>
    %61 = vector.extract_strided_slice %40 {offsets = [0, 8], sizes = [8, 8], strides = [1, 1]} : vector<8x32xbf16> to vector<8x8xbf16>
    %cst_20 = arith.constant dense<0.000000e+00> : vector<8x8xf32>
    %62 = tpu.matmul %59, %60, %cst_20 {dimension_numbers = #tpu.dot_dimension_numbers<[1], [1], [0], [0], [0, 0, 1, 0], [], []>} : vector<8x8xbf16>, vector<8x8xbf16>, vector<8x8xf32> -> vector<8x8xf32>
    %cst_21 = arith.constant dense<0xFF800000> : vector<8xf32>
    %63 = vector.multi_reduction <maximumf>, %62, %cst_21 [1] : vector<8x8xf32> to vector<8xf32>
    %64 = vector.shape_cast %63 : vector<8xf32> to vector<8x1xf32>
    %65 = vector.broadcast %64 : vector<8x1xf32> to vector<8x8xf32>
    %66 = arith.subf %62, %65 : vector<8x8xf32>
    %67 = math.exp %66 : vector<8x8xf32>
    %cst_22 = arith.constant dense<0.000000e+00> : vector<8xf32>
    %68 = vector.multi_reduction <add>, %67, %cst_22 [1] : vector<8x8xf32> to vector<8xf32>
    %69 = vector.shape_cast %68 : vector<8xf32> to vector<8x1xf32>
    %70 = tpu.reciprocal %69 {approx = true} : vector<8x1xf32> -> vector<8x1xf32>
    %71 = vector.broadcast %70 : vector<8x1xf32> to vector<8x8xf32>
    %72 = arith.mulf %67, %71 : vector<8x8xf32>
    %73 = arith.truncf %72 : vector<8x8xf32> to vector<8x8xbf16>
    %cst_23 = arith.constant dense<0.000000e+00> : vector<8x8xf32>
    %74 = tpu.matmul %73, %61, %cst_23 {dimension_numbers = #tpu.dot_dimension_numbers<[1], [0], [0], [1], [0, 0, 1, 1], [], []>} : vector<8x8xbf16>, vector<8x8xbf16>, vector<8x8xf32> -> vector<8x8xf32>
    %75 = arith.truncf %74 : vector<8x8xf32> to vector<8x8xbf16>
    %c0_24 = arith.constant 0 : index
    %c8 = arith.constant 8 : index
    %76 = vector.load %arg14[%c0_24, %c8] : memref<8x32xbf16, #tpu.memory_space<vmem>>, vector<8x8xbf16>
    tpu.vector_store %arg14[%c0_24, %c8], %75 {strides = array<i32>} : memref<8x32xbf16, #tpu.memory_space<vmem>>, vector<8x8xbf16>,
    %77 = vector.extract_strided_slice %36 {offsets = [0, 16], sizes = [8, 8], strides = [1, 1]} : vector<8x32xbf16> to vector<8x8xbf16>
    %78 = vector.extract_strided_slice %38 {offsets = [0, 16], sizes = [8, 8], strides = [1, 1]} : vector<8x32xbf16> to vector<8x8xbf16>
    %79 = vector.extract_strided_slice %40 {offsets = [0, 16], sizes = [8, 8], strides = [1, 1]} : vector<8x32xbf16> to vector<8x8xbf16>
    %cst_25 = arith.constant dense<0.000000e+00> : vector<8x8xf32>
    %80 = tpu.matmul %77, %78, %cst_25 {dimension_numbers = #tpu.dot_dimension_numbers<[1], [1], [0], [0], [0, 0, 1, 0], [], []>} : vector<8x8xbf16>, vector<8x8xbf16>, vector<8x8xf32> -> vector<8x8xf32>
    %cst_26 = arith.constant dense<0xFF800000> : vector<8xf32>
    %81 = vector.multi_reduction <maximumf>, %80, %cst_26 [1] : vector<8x8xf32> to vector<8xf32>
    %82 = vector.shape_cast %81 : vector<8xf32> to vector<8x1xf32>
    %83 = vector.broadcast %82 : vector<8x1xf32> to vector<8x8xf32>
    %84 = arith.subf %80, %83 : vector<8x8xf32>
    %85 = math.exp %84 : vector<8x8xf32>
    %cst_27 = arith.constant dense<0.000000e+00> : vector<8xf32>
    %86 = vector.multi_reduction <add>, %85, %cst_27 [1] : vector<8x8xf32> to vector<8xf32>
    %87 = vector.shape_cast %86 : vector<8xf32> to vector<8x1xf32>
    %88 = tpu.reciprocal %87 {approx = true} : vector<8x1xf32> -> vector<8x1xf32>
    %89 = vector.broadcast %88 : vector<8x1xf32> to vector<8x8xf32>
    %90 = arith.mulf %85, %89 : vector<8x8xf32>
    %91 = arith.truncf %90 : vector<8x8xf32> to vector<8x8xbf16>
    %cst_28 = arith.constant dense<0.000000e+00> : vector<8x8xf32>
    %92 = tpu.matmul %91, %79, %cst_28 {dimension_numbers = #tpu.dot_dimension_numbers<[1], [0], [0], [1], [0, 0, 1, 1], [], []>} : vector<8x8xbf16>, vector<8x8xbf16>, vector<8x8xf32> -> vector<8x8xf32>
    %93 = arith.truncf %92 : vector<8x8xf32> to vector<8x8xbf16>
    %c0_29 = arith.constant 0 : index
    %c16 = arith.constant 16 : index
    %94 = vector.load %arg14[%c0_29, %c16] : memref<8x32xbf16, #tpu.memory_space<vmem>>, vector<8x8xbf16>
    tpu.vector_store %arg14[%c0_29, %c16], %93 {strides = array<i32>} : memref<8x32xbf16, #tpu.memory_space<vmem>>, vector<8x8xbf16>,
    %95 = vector.extract_strided_slice %36 {offsets = [0, 24], sizes = [8, 8], strides = [1, 1]} : vector<8x32xbf16> to vector<8x8xbf16>
    %96 = vector.extract_strided_slice %38 {offsets = [0, 24], sizes = [8, 8], strides = [1, 1]} : vector<8x32xbf16> to vector<8x8xbf16>
    %97 = vector.extract_strided_slice %40 {offsets = [0, 24], sizes = [8, 8], strides = [1, 1]} : vector<8x32xbf16> to vector<8x8xbf16>
    %cst_30 = arith.constant dense<0.000000e+00> : vector<8x8xf32>
    %98 = tpu.matmul %95, %96, %cst_30 {dimension_numbers = #tpu.dot_dimension_numbers<[1], [1], [0], [0], [0, 0, 1, 0], [], []>} : vector<8x8xbf16>, vector<8x8xbf16>, vector<8x8xf32> -> vector<8x8xf32>
    %cst_31 = arith.constant dense<0xFF800000> : vector<8xf32>
    %99 = vector.multi_reduction <maximumf>, %98, %cst_31 [1] : vector<8x8xf32> to vector<8xf32>
    %100 = vector.shape_cast %99 : vector<8xf32> to vector<8x1xf32>
    %101 = vector.broadcast %100 : vector<8x1xf32> to vector<8x8xf32>
    %102 = arith.subf %98, %101 : vector<8x8xf32>
    %103 = math.exp %102 : vector<8x8xf32>
    %cst_32 = arith.constant dense<0.000000e+00> : vector<8xf32>
    %104 = vector.multi_reduction <add>, %103, %cst_32 [1] : vector<8x8xf32> to vector<8xf32>
    %105 = vector.shape_cast %104 : vector<8xf32> to vector<8x1xf32>
    %106 = tpu.reciprocal %105 {approx = true} : vector<8x1xf32> -> vector<8x1xf32>
    %107 = vector.broadcast %106 : vector<8x1xf32> to vector<8x8xf32>
    %108 = arith.mulf %103, %107 : vector<8x8xf32>
    %109 = arith.truncf %108 : vector<8x8xf32> to vector<8x8xbf16>
    %cst_33 = arith.constant dense<0.000000e+00> : vector<8x8xf32>
    %110 = tpu.matmul %109, %97, %cst_33 {dimension_numbers = #tpu.dot_dimension_numbers<[1], [0], [0], [1], [0, 0, 1, 1], [], []>} : vector<8x8xbf16>, vector<8x8xbf16>, vector<8x8xf32> -> vector<8x8xf32>
    %111 = arith.truncf %110 : vector<8x8xf32> to vector<8x8xbf16>
    %c0_34 = arith.constant 0 : index
    %c24 = arith.constant 24 : index
    %112 = vector.load %arg14[%c0_34, %c24] : memref<8x32xbf16, #tpu.memory_space<vmem>>, vector<8x8xbf16>
    tpu.vector_store %arg14[%c0_34, %c24], %111 {strides = array<i32>} : memref<8x32xbf16, #tpu.memory_space<vmem>>, vector<8x8xbf16>,
    %c0_35 = arith.constant 0 : index
    %c0_36 = arith.constant 0 : index
    %113 = vector.load %arg14[%c0_35, %c0_36] : memref<8x32xbf16, #tpu.memory_space<vmem>>, vector<8x32xbf16>
    %c0_37 = arith.constant 0 : index
    %c0_38 = arith.constant 0 : index
    %114 = vector.load %arg5[%c0_37, %c0_38] : memref<32x32xbf16, #tpu.memory_space<vmem>>, vector<32x32xbf16>
    %cst_39 = arith.constant dense<0.000000e+00> : vector<8x32xf32>
    %115 = tpu.matmul %113, %114, %cst_39 {dimension_numbers = #tpu.dot_dimension_numbers<[1], [0], [0], [1], [0, 0, 1, 1], [], []>} : vector<8x32xbf16>, vector<32x32xbf16>, vector<8x32xf32> -> vector<8x32xf32>
    %c0_40 = arith.constant 0 : index
    %c0_41 = arith.constant 0 : index
    %116 = vector.load %arg6[%c0_40, %c0_41] : memref<1x32xf32, #tpu.memory_space<vmem>>, vector<1x32xf32>
    %117 = vector.shape_cast %116 : vector<1x32xf32> to vector<32xf32>
    %118 = vector.shape_cast %117 : vector<32xf32> to vector<1x32xf32>
    %119 = vector.broadcast %118 : vector<1x32xf32> to vector<8x32xf32>
    %120 = arith.addf %115, %119 : vector<8x32xf32>
    %121 = arith.addf %1, %120 : vector<8x32xf32>
    %c0_42 = arith.constant 0 : index
    %c0_43 = arith.constant 0 : index
    %122 = vector.load %arg7[%c0_42, %c0_43] : memref<1x32xf32, #tpu.memory_space<vmem>>, vector<1x32xf32>
    %123 = vector.shape_cast %122 : vector<1x32xf32> to vector<32xf32>
    %c0_44 = arith.constant 0 : index
    %c0_45 = arith.constant 0 : index
    %124 = vector.load %arg8[%c0_44, %c0_45] : memref<1x32xf32, #tpu.memory_space<vmem>>, vector<1x32xf32>
    %125 = vector.shape_cast %124 : vector<1x32xf32> to vector<32xf32>
    %cst_46 = arith.constant dense<0.000000e+00> : vector<8xf32>
    %126 = vector.multi_reduction <add>, %121, %cst_46 [1] : vector<8x32xf32> to vector<8xf32>
    %127 = vector.shape_cast %126 : vector<8xf32> to vector<8x1xf32>
    %cst_47 = arith.constant 3.200000e+01 : f32
    %128 = vector.broadcast %cst_47 : f32 to vector<8x1xf32>
    %129 = arith.divf %127, %128 : vector<8x1xf32>
    %130 = vector.broadcast %129 : vector<8x1xf32> to vector<8x32xf32>
    %131 = arith.subf %121, %130 : vector<8x32xf32>
    %132 = arith.mulf %131, %131 : vector<8x32xf32>
    %cst_48 = arith.constant dense<0.000000e+00> : vector<8xf32>
    %133 = vector.multi_reduction <add>, %132, %cst_48 [1] : vector<8x32xf32> to vector<8xf32>
    %134 = vector.shape_cast %133 : vector<8xf32> to vector<8x1xf32>
    %cst_49 = arith.constant 3.200000e+01 : f32
    %135 = vector.broadcast %cst_49 : f32 to vector<8x1xf32>
    %136 = arith.divf %134, %135 : vector<8x1xf32>
    %137 = vector.broadcast %129 : vector<8x1xf32> to vector<8x32xf32>
    %138 = arith.subf %121, %137 : vector<8x32xf32>
    %cst_50 = arith.constant 9.99999997E-7 : f32
    %139 = vector.broadcast %cst_50 : f32 to vector<8x1xf32>
    %140 = arith.addf %136, %139 : vector<8x1xf32>
    %141 = math.rsqrt %140 : vector<8x1xf32>
    %142 = vector.broadcast %141 : vector<8x1xf32> to vector<8x32xf32>
    %143 = arith.mulf %138, %142 : vector<8x32xf32>
    %144 = vector.shape_cast %123 : vector<32xf32> to vector<1x32xf32>
    %145 = vector.broadcast %144 : vector<1x32xf32> to vector<8x32xf32>
    %146 = arith.mulf %143, %145 : vector<8x32xf32>
    %147 = vector.shape_cast %125 : vector<32xf32> to vector<1x32xf32>
    %148 = vector.broadcast %147 : vector<1x32xf32> to vector<8x32xf32>
    %149 = arith.addf %146, %148 : vector<8x32xf32>
    %150 = arith.truncf %149 : vector<8x32xf32> to vector<8x32xbf16>
    %c0_51 = arith.constant 0 : index
    %c0_52 = arith.constant 0 : index
    %151 = vector.load %arg9[%c0_51, %c0_52] : memref<32x64xbf16, #tpu.memory_space<vmem>>, vector<32x64xbf16>
    %cst_53 = arith.constant dense<0.000000e+00> : vector<8x64xf32>
    %152 = tpu.matmul %150, %151, %cst_53 {dimension_numbers = #tpu.dot_dimension_numbers<[1], [0], [0], [1], [0, 0, 1, 1], [], []>} : vector<8x32xbf16>, vector<32x64xbf16>, vector<8x64xf32> -> vector<8x64xf32>
    %c0_54 = arith.constant 0 : index
    %c0_55 = arith.constant 0 : index
    %153 = vector.load %arg10[%c0_54, %c0_55] : memref<1x64xf32, #tpu.memory_space<vmem>>, vector<1x64xf32>
    %154 = vector.shape_cast %153 : vector<1x64xf32> to vector<64xf32>
    %155 = vector.shape_cast %154 : vector<64xf32> to vector<1x64xf32>
    %156 = vector.broadcast %155 : vector<1x64xf32> to vector<8x64xf32>
    %157 = arith.addf %152, %156 : vector<8x64xf32>
    %cst_56 = arith.constant 5.000000e-01 : f32
    %158 = vector.broadcast %cst_56 : f32 to vector<8x64xf32>
    %159 = arith.mulf %158, %157 : vector<8x64xf32>
    %cst_57 = arith.constant 0.707106769 : f32
    %160 = vector.broadcast %cst_57 : f32 to vector<8x64xf32>
    %161 = arith.mulf %157, %160 : vector<8x64xf32>
    %162 = math.erf %161 : vector<8x64xf32>
    %cst_58 = arith.constant 1.000000e+00 : f32
    %163 = vector.broadcast %cst_58 : f32 to vector<8x64xf32>
    %164 = arith.addf %163, %162 : vector<8x64xf32>
    %165 = arith.mulf %159, %164 : vector<8x64xf32>
    %166 = arith.truncf %165 : vector<8x64xf32> to vector<8x64xbf16>
    %c0_59 = arith.constant 0 : index
    %c0_60 = arith.constant 0 : index
    %167 = vector.load %arg11[%c0_59, %c0_60] : memref<64x32xbf16, #tpu.memory_space<vmem>>, vector<64x32xbf16>
    %cst_61 = arith.constant dense<0.000000e+00> : vector<8x32xf32>
    %168 = tpu.matmul %166, %167, %cst_61 {dimension_numbers = #tpu.dot_dimension_numbers<[1], [0], [0], [1], [0, 0, 1, 1], [], []>} : vector<8x64xbf16>, vector<64x32xbf16>, vector<8x32xf32> -> vector<8x32xf32>
    %c0_62 = arith.constant 0 : index
    %c0_63 = arith.constant 0 : index
    %169 = vector.load %arg12[%c0_62, %c0_63] : memref<1x32xf32, #tpu.memory_space<vmem>>, vector<1x32xf32>
    %170 = vector.shape_cast %169 : vector<1x32xf32> to vector<32xf32>
    %171 = vector.shape_cast %170 : vector<32xf32> to vector<1x32xf32>
    %172 = vector.broadcast %171 : vector<1x32xf32> to vector<8x32xf32>
    %173 = arith.addf %168, %172 : vector<8x32xf32>
    %174 = arith.addf %121, %173 : vector<8x32xf32>
    %c0_64 = arith.constant 0 : index
    %c0_65 = arith.constant 0 : index
    %c0_66 = arith.constant 0 : index
    %175 = vector.load %arg13[%c0_64, %c0_65, %c0_66] : memref<1x8x32xf32, #tpu.memory_space<vmem>>, vector<1x8x32xf32>
    %176 = vector.shape_cast %175 : vector<1x8x32xf32> to vector<8x32xf32>
    %177 = vector.shape_cast %174 : vector<8x32xf32> to vector<1x8x32xf32>
    tpu.vector_store %arg13[%c0_64, %c0_65, %c0_66], %177 {strides = array<i32>} : memref<1x8x32xf32, #tpu.memory_space<vmem>>, vector<1x8x32xf32>,
    return
  }
  func.func @transform_0(%arg0: i32) -> (i32, i32, i32) {
    %c0_i32 = arith.constant 0 : i32
    %c0_i32_0 = arith.constant 0 : i32
    %c0_i32_1 = arith.constant 0 : i32
    return %arg0, %c0_i32, %c0_i32_0 : i32, i32, i32
  }
  func.func @transform_1(%arg0: i32) -> (i32, i32) {
    %c0_i32 = arith.constant 0 : i32
    %c0_i32_0 = arith.constant 0 : i32
    %c0_i32_1 = arith.constant 0 : i32
    return %c0_i32, %c0_i32_0 : i32, i32
  }
  func.func @transform_2(%arg0: i32) -> (i32, i32) {
    %c0_i32 = arith.constant 0 : i32
    %c0_i32_0 = arith.constant 0 : i32
    %c0_i32_1 = arith.constant 0 : i32
    return %c0_i32, %c0_i32_0 : i32, i32
  }
  func.func @transform_3(%arg0: i32) -> (i32, i32) {
    %c0_i32 = arith.constant 0 : i32
    %c0_i32_0 = arith.constant 0 : i32
    %c0_i32_1 = arith.constant 0 : i32
    return %c0_i32, %c0_i32_0 : i32, i32
  }
  func.func @transform_4(%arg0: i32) -> (i32, i32) {
    %c0_i32 = arith.constant 0 : i32
    %c0_i32_0 = arith.constant 0 : i32
    %c0_i32_1 = arith.constant 0 : i32
    return %c0_i32, %c0_i32_0 : i32, i32
  }
  func.func @transform_5(%arg0: i32) -> (i32, i32) {
    %c0_i32 = arith.constant 0 : i32
    %c0_i32_0 = arith.constant 0 : i32
    %c0_i32_1 = arith.constant 0 : i32
    return %c0_i32, %c0_i32_0 : i32, i32
  }
  func.func @transform_6(%arg0: i32) -> (i32, i32) {
    %c0_i32 = arith.constant 0 : i32
    %c0_i32_0 = arith.constant 0 : i32
    %c0_i32_1 = arith.constant 0 : i32
    return %c0_i32, %c0_i32_0 : i32, i32
  }
  func.func @transform_7(%arg0: i32) -> (i32, i32) {
    %c0_i32 = arith.constant 0 : i32
    %c0_i32_0 = arith.constant 0 : i32
    %c0_i32_1 = arith.constant 0 : i32
    return %c0_i32, %c0_i32_0 : i32, i32
  }
  func.func @transform_8(%arg0: i32) -> (i32, i32) {
    %c0_i32 = arith.constant 0 : i32
    %c0_i32_0 = arith.constant 0 : i32
    %c0_i32_1 = arith.constant 0 : i32
    return %c0_i32, %c0_i32_0 : i32, i32
  }
  func.func @transform_9(%arg0: i32) -> (i32, i32) {
    %c0_i32 = arith.constant 0 : i32
    %c0_i32_0 = arith.constant 0 : i32
    %c0_i32_1 = arith.constant 0 : i32
    return %c0_i32, %c0_i32_0 : i32, i32
  }
  func.func @transform_10(%arg0: i32) -> (i32, i32) {
    %c0_i32 = arith.constant 0 : i32
    %c0_i32_0 = arith.constant 0 : i32
    %c0_i32_1 = arith.constant 0 : i32
    return %c0_i32, %c0_i32_0 : i32, i32
  }
  func.func @transform_11(%arg0: i32) -> (i32, i32) {
    %c0_i32 = arith.constant 0 : i32
    %c0_i32_0 = arith.constant 0 : i32
    %c0_i32_1 = arith.constant 0 : i32
    return %c0_i32, %c0_i32_0 : i32, i32
  }
  func.func @transform_12(%arg0: i32) -> (i32, i32, i32) {
    %c0_i32 = arith.constant 0 : i32
    %c0_i32_0 = arith.constant 0 : i32
    %c0_i32_1 = arith.constant 0 : i32
    return %arg0, %c0_i32, %c0_i32_0 : i32, i32, i32
  }
}

</mosaic_0001>

<llo_original>
// kernel: tpu_custom_call.1
$region0: #{tpu_custom_call.1}
  #allocation0 [shape = 'u32[]', space=smem, size = 0x4, offset = 0x4, fixed_abs, tag = 'smem constant byte address 0x4 - core index']
  #allocation1 [shape = 'u32[144,128]{1,0:T(1,128)}', space=vmem, size = 0x12000, scoped, tag = 'internal scratch']
  #allocation2 [shape = 'bf16[8,32]{1,0:T(8,128)(2,1)}', space=vmem, size = 0x800, scoped, tag = 'scratch operand']
  %s0 = inlined_call_operand.vmem [shape: f32[2,8,32], index: 0, kind: input, shape index: {}]
  %s1 = inlined_call_operand.vmem [shape: f32[1,32], index: 1, kind: input, shape index: {}]
  %s2 = inlined_call_operand.vmem [shape: f32[1,32], index: 2, kind: input, shape index: {}]
  %s3 = inlined_call_operand.vmem [shape: bf16[32,96], index: 3, kind: input, shape index: {}]
  %s4 = inlined_call_operand.vmem [shape: bf16[32,32], index: 4, kind: input, shape index: {}]
  %s5 = inlined_call_operand.vmem [shape: f32[1,32], index: 5, kind: input, shape index: {}]
  %s6 = inlined_call_operand.vmem [shape: f32[1,32], index: 6, kind: input, shape index: {}]
  %s7 = inlined_call_operand.vmem [shape: f32[1,32], index: 7, kind: input, shape index: {}]
  %s8 = inlined_call_operand.hbm [shape: bf16[32,64], index: 8, kind: input, shape index: {}]
  %s9 = inlined_call_operand.vmem [shape: f32[1,64], index: 9, kind: input, shape index: {}]
  %s10 = inlined_call_operand.vmem [shape: bf16[64,32], index: 10, kind: input, shape index: {}]
  %s11 = inlined_call_operand.vmem [shape: f32[1,32], index: 11, kind: input, shape index: {}]
  %s12 = inlined_call_operand.hbm [shape: f32[2,8,32], index: 12, kind: output, shape index: {}]
  %s13 = sld [smem:[#allocation0]]
  $region85: #{tpu_custom_call.1} parent=0
    _
  %s15 = ssub.s32 1, %s13
  %s16 = scalar_select 0, %s15, %s13
  $region1: #{tpu_custom_call.1} parent=0
    #allocation3 [shape = 'u8[8192]{0}', space=vmem, size = 0x2000, scoped, tag = 'input window, operand 8, single buffered']
    #allocation4 [shape = 's32[2]{0}', space=sflag, size = 0x8, scoped, tag = 'scoped memory for tpu_custom_call.1']
    #allocation5 [shape = 's32[2]{0}', space=sflag, size = 0x8, scoped, tag = 'scoped memory for tpu_custom_call.1']
    #allocation6 [shape = 'u8[8192]{0}', space=vmem, size = 0x2000, scoped, tag = 'output window, operand 0']
    %17 = vsyncpa [#allocation4], 0
    %18 = vsyncpa [#allocation5], 0
    %s19 = scalar_lea.sflag [#allocation5], 1
    %20 = vsyncpa %s19, 0
    loop: start=0, step=1, limit=4
    $region2: #{tpu_custom_call.1} parent=1 // loop_pre_header
      _
    $region3: #{tpu_custom_call.1} parent=1 // loop_header
      %s22 = sphi 0, %s26
      %p23 = scmp.ge.s32.totalorder %s22, 4
      %s32 = sphi 0, %s34
      %s35 = sphi 0, %s32
      %s36 = sphi 0, %s35
      %s52 = sphi 0, %s36
      %s56 = sphi 0, %s56
      %s58 = sphi 0, %s56
      %s59 = sphi 0, %s58
      %s73 = sphi 0, %s59
      %s77 = sphi 0, %s77
      %s79 = sphi 0, %s77
      %s80 = sphi 0, %s79
      %s94 = sphi 0, %s80
      %s98 = sphi 0, %s98
      %s100 = sphi 0, %s98
      %s101 = sphi 0, %s100
      %s115 = sphi 0, %s101
      %s119 = sphi 0, %s119
      %s121 = sphi 0, %s119
      %s122 = sphi 0, %s121
      %s136 = sphi 0, %s122
      %s140 = sphi 0, %s140
      %s142 = sphi 0, %s140
      %s143 = sphi 0, %s142
      %s157 = sphi 0, %s143
      %s161 = sphi 0, %s161
      %s163 = sphi 0, %s161
      %s164 = sphi 0, %s163
      %s178 = sphi 0, %s164
      %s182 = sphi 0, %s182
      %s184 = sphi 0, %s182
      %s185 = sphi 0, %s184
      %s199 = sphi 0, %s185
      %s203 = sphi 0, %s203
      %s205 = sphi 0, %s203
      %s206 = sphi 0, %s205
      %s220 = sphi 0, %s206
      %s224 = sphi 0, %s224
      %s226 = sphi 0, %s224
      %s227 = sphi 0, %s226
      %s241 = sphi 0, %s227
      %s245 = sphi 0, %s245
      %s247 = sphi 0, %s245
      %s248 = sphi 0, %s247
      %s262 = sphi 0, %s248
      %s266 = sphi 0, %s266
      %s268 = sphi 0, %s266
      %s269 = sphi 0, %s268
      %s283 = sphi 0, %s269
      %s289 = sphi 0, %s291
      %s292 = sphi 0, %s289
      %s293 = sphi 0, %s292
      %s309 = sphi 0, %s293
    $region4: #{tpu_custom_call.1} parent=1 // loop_header_branch
      %25 = sbr.rel (%p23) target = $region8
    $region5: #{tpu_custom_call.1} parent=1 // loop_body
      %s27 = ssub.s32 %s22, 1
      %s28 = ssub.s32 %s22, 2
      %s29 = sadd.s32 %s22, 1
      %s30 = ssub.s32 %s22, %s29
      %p31 = scmp.eq.s32.totalorder %s30, 0
      %s33 = sadd.s32 %s32, 1
      %s34 = scalar_select %p31, %s32, %s33
      %p37 = pneg %p31
      %p38 = scmp.eq.s32.totalorder %s22, 1
      %p39 = por %p37, %p38
      %p40 = scmp.ne.s32.totalorder %s32, %s35
      %p41 = scmp.eq.s32.totalorder %s22, 0
      %p42 = por %p40, %p41
      %p43 = scmp.ne.s32.totalorder %s32, %s35
      %p44 = scmp.eq.s32.totalorder %s27, 1
      %p45 = por %p43, %p44
      %p46 = scmp.ne.s32.totalorder %s35, %s36
      %p47 = scmp.eq.s32.totalorder %s27, 0
      %p48 = por %p46, %p47
      %p49 = scmp.ne.s32.totalorder %s35, %s36
      %p50 = scmp.eq.s32.totalorder %s28, 1
      %p51 = por %p49, %p50
      %p53 = scmp.ne.s32.totalorder %s36, %s52
      %p54 = scmp.eq.s32.totalorder %s28, 0
      %p55 = por %p53, %p54
      %s57 = sadd.s32 %s56, 1
      %p60 = scmp.eq.s32.totalorder %s22, 1
      %p61 = scmp.ne.s32.totalorder %s56, %s58
      %p62 = scmp.eq.s32.totalorder %s22, 0
      %p63 = por %p61, %p62
      %p64 = scmp.ne.s32.totalorder %s56, %s58
      %p65 = scmp.eq.s32.totalorder %s27, 1
      %p66 = por %p64, %p65
      %p67 = scmp.ne.s32.totalorder %s58, %s59
      %p68 = scmp.eq.s32.totalorder %s27, 0
      %p69 = por %p67, %p68
      %p70 = scmp.ne.s32.totalorder %s58, %s59
      %p71 = scmp.eq.s32.totalorder %s28, 1
      %p72 = por %p70, %p71
      %p74 = scmp.ne.s32.totalorder %s59, %s73
      %p75 = scmp.eq.s32.totalorder %s28, 0
      %p76 = por %p74, %p75
      %s78 = sadd.s32 %s77, 1
      %p81 = scmp.eq.s32.totalorder %s22, 1
      %p82 = scmp.ne.s32.totalorder %s77, %s79
      %p83 = scmp.eq.s32.totalorder %s22, 0
      %p84 = por %p82, %p83
      %p85 = scmp.ne.s32.totalorder %s77, %s79
      %p86 = scmp.eq.s32.totalorder %s27, 1
      %p87 = por %p85, %p86
      %p88 = scmp.ne.s32.totalorder %s79, %s80
      %p89 = scmp.eq.s32.totalorder %s27, 0
      %p90 = por %p88, %p89
      %p91 = scmp.ne.s32.totalorder %s79, %s80
      %p92 = scmp.eq.s32.totalorder %s28, 1
      %p93 = por %p91, %p92
      %p95 = scmp.ne.s32.totalorder %s80, %s94
      %p96 = scmp.eq.s32.totalorder %s28, 0
      %p97 = por %p95, %p96
      %s99 = sadd.s32 %s98, 1
      %p102 = scmp.eq.s32.totalorder %s22, 1
      %p103 = scmp.ne.s32.totalorder %s98, %s100
      %p104 = scmp.eq.s32.totalorder %s22, 0
      %p105 = por %p103, %p104
      %p106 = scmp.ne.s32.totalorder %s98, %s100
      %p107 = scmp.eq.s32.totalorder %s27, 1
      %p108 = por %p106, %p107
      %p109 = scmp.ne.s32.totalorder %s100, %s101
      %p110 = scmp.eq.s32.totalorder %s27, 0
      %p111 = por %p109, %p110
      %p112 = scmp.ne.s32.totalorder %s100, %s101
      %p113 = scmp.eq.s32.totalorder %s28, 1
      %p114 = por %p112, %p113
      %p116 = scmp.ne.s32.totalorder %s101, %s115
      %p117 = scmp.eq.s32.totalorder %s28, 0
      %p118 = por %p116, %p117
      %s120 = sadd.s32 %s119, 1
      %p123 = scmp.eq.s32.totalorder %s22, 1
      %p124 = scmp.ne.s32.totalorder %s119, %s121
      %p125 = scmp.eq.s32.totalorder %s22, 0
      %p126 = por %p124, %p125
      %p127 = scmp.ne.s32.totalorder %s119, %s121
      %p128 = scmp.eq.s32.totalorder %s27, 1
      %p129 = por %p127, %p128
      %p130 = scmp.ne.s32.totalorder %s121, %s122
      %p131 = scmp.eq.s32.totalorder %s27, 0
      %p132 = por %p130, %p131
      %p133 = scmp.ne.s32.totalorder %s121, %s122
      %p134 = scmp.eq.s32.totalorder %s28, 1
      %p135 = por %p133, %p134
      %p137 = scmp.ne.s32.totalorder %s122, %s136
      %p138 = scmp.eq.s32.totalorder %s28, 0
      %p139 = por %p137, %p138
      %s141 = sadd.s32 %s140, 1
      %p144 = scmp.eq.s32.totalorder %s22, 1
      %p145 = scmp.ne.s32.totalorder %s140, %s142
      %p146 = scmp.eq.s32.totalorder %s22, 0
      %p147 = por %p145, %p146
      %p148 = scmp.ne.s32.totalorder %s140, %s142
      %p149 = scmp.eq.s32.totalorder %s27, 1
      %p150 = por %p148, %p149
      %p151 = scmp.ne.s32.totalorder %s142, %s143
      %p152 = scmp.eq.s32.totalorder %s27, 0
      %p153 = por %p151, %p152
      %p154 = scmp.ne.s32.totalorder %s142, %s143
      %p155 = scmp.eq.s32.totalorder %s28, 1
      %p156 = por %p154, %p155
      %p158 = scmp.ne.s32.totalorder %s143, %s157
      %p159 = scmp.eq.s32.totalorder %s28, 0
      %p160 = por %p158, %p159
      %s162 = sadd.s32 %s161, 1
      %p165 = scmp.eq.s32.totalorder %s22, 1
      %p166 = scmp.ne.s32.totalorder %s161, %s163
      %p167 = scmp.eq.s32.totalorder %s22, 0
      %p168 = por %p166, %p167
      %p169 = scmp.ne.s32.totalorder %s161, %s163
      %p170 = scmp.eq.s32.totalorder %s27, 1
      %p171 = por %p169, %p170
      %p172 = scmp.ne.s32.totalorder %s163, %s164
      %p173 = scmp.eq.s32.totalorder %s27, 0
      %p174 = por %p172, %p173
      %p175 = scmp.ne.s32.totalorder %s163, %s164
      %p176 = scmp.eq.s32.totalorder %s28, 1
      %p177 = por %p175, %p176
      %p179 = scmp.ne.s32.totalorder %s164, %s178
      %p180 = scmp.eq.s32.totalorder %s28, 0
      %p181 = por %p179, %p180
      %s183 = sadd.s32 %s182, 1
      %p186 = scmp.eq.s32.totalorder %s22, 1
      %p187 = scmp.ne.s32.totalorder %s182, %s184
      %p188 = scmp.eq.s32.totalorder %s22, 0
      %p189 = por %p187, %p188
      %p190 = scmp.ne.s32.totalorder %s182, %s184
      %p191 = scmp.eq.s32.totalorder %s27, 1
      %p192 = por %p190, %p191
      %p193 = scmp.ne.s32.totalorder %s184, %s185
      %p194 = scmp.eq.s32.totalorder %s27, 0
      %p195 = por %p193, %p194
      %p196 = scmp.ne.s32.totalorder %s184, %s185
      %p197 = scmp.eq.s32.totalorder %s28, 1
      %p198 = por %p196, %p197
      %p200 = scmp.ne.s32.totalorder %s185, %s199
      %p201 = scmp.eq.s32.totalorder %s28, 0
      %p202 = por %p200, %p201
      %s204 = sadd.s32 %s203, 1
      %p207 = scmp.eq.s32.totalorder %s22, 1
      %p208 = scmp.ne.s32.totalorder %s203, %s205
      %p209 = scmp.eq.s32.totalorder %s22, 0
      %p210 = por %p208, %p209
      %p211 = scmp.ne.s32.totalorder %s203, %s205
      %p212 = scmp.eq.s32.totalorder %s27, 1
      %p213 = por %p211, %p212
      %p214 = scmp.ne.s32.totalorder %s205, %s206
      %p215 = scmp.eq.s32.totalorder %s27, 0
      %p216 = por %p214, %p215
      %p217 = scmp.ne.s32.totalorder %s205, %s206
      %p218 = scmp.eq.s32.totalorder %s28, 1
      %p219 = por %p217, %p218
      %p221 = scmp.ne.s32.totalorder %s206, %s220
      %p222 = scmp.eq.s32.totalorder %s28, 0
      %p223 = por %p221, %p222
      %s225 = sadd.s32 %s224, 1
      %p228 = scmp.eq.s32.totalorder %s22, 1
      %p229 = scmp.ne.s32.totalorder %s224, %s226
      %p230 = scmp.eq.s32.totalorder %s22, 0
      %p231 = por %p229, %p230
      %p232 = scmp.ne.s32.totalorder %s224, %s226
      %p233 = scmp.eq.s32.totalorder %s27, 1
      %p234 = por %p232, %p233
      %p235 = scmp.ne.s32.totalorder %s226, %s227
      %p236 = scmp.eq.s32.totalorder %s27, 0
      %p237 = por %p235, %p236
      %p238 = scmp.ne.s32.totalorder %s226, %s227
      %p239 = scmp.eq.s32.totalorder %s28, 1
      %p240 = por %p238, %p239
      %p242 = scmp.ne.s32.totalorder %s227, %s241
      %p243 = scmp.eq.s32.totalorder %s28, 0
      %p244 = por %p242, %p243
      %s246 = sadd.s32 %s245, 1
      %p249 = scmp.eq.s32.totalorder %s22, 1
      %p250 = scmp.ne.s32.totalorder %s245, %s247
      %p251 = scmp.eq.s32.totalorder %s22, 0
      %p252 = por %p250, %p251
      %p253 = scmp.ne.s32.totalorder %s245, %s247
      %p254 = scmp.eq.s32.totalorder %s27, 1
      %p255 = por %p253, %p254
      %p256 = scmp.ne.s32.totalorder %s247, %s248
      %p257 = scmp.eq.s32.totalorder %s27, 0
      %p258 = por %p256, %p257
      %p259 = scmp.ne.s32.totalorder %s247, %s248
      %p260 = scmp.eq.s32.totalorder %s28, 1
      %p261 = por %p259, %p260
      %p263 = scmp.ne.s32.totalorder %s248, %s262
      %p264 = scmp.eq.s32.totalorder %s28, 0
      %p265 = por %p263, %p264
      %s267 = sadd.s32 %s266, 1
      %p270 = scmp.eq.s32.totalorder %s22, 1
      %p271 = scmp.ne.s32.totalorder %s266, %s268
      %p272 = scmp.eq.s32.totalorder %s22, 0
      %p273 = por %p271, %p272
      %p274 = scmp.ne.s32.totalorder %s266, %s268
      %p275 = scmp.eq.s32.totalorder %s27, 1
      %p276 = por %p274, %p275
      %p277 = scmp.ne.s32.totalorder %s268, %s269
      %p278 = scmp.eq.s32.totalorder %s27, 0
      %p279 = por %p277, %p278
      %p280 = scmp.ne.s32.totalorder %s268, %s269
      %p281 = scmp.eq.s32.totalorder %s28, 1
      %p282 = por %p280, %p281
      %p284 = scmp.ne.s32.totalorder %s269, %s283
      %p285 = scmp.eq.s32.totalorder %s28, 0
      %p286 = por %p284, %p285
      %s287 = ssub.s32 %s22, %s29
      %p288 = scmp.eq.s32.totalorder %s287, 0
      %s290 = sadd.s32 %s289, 1
      %s291 = scalar_select %p288, %s289, %s290
      %p294 = pneg %p288
      %p295 = scmp.eq.s32.totalorder %s22, 1
      %p296 = por %p294, %p295
      %p297 = scmp.ne.s32.totalorder %s289, %s292
      %p298 = scmp.eq.s32.totalorder %s22, 0
      %p299 = por %p297, %p298
      %p300 = scmp.ne.s32.totalorder %s289, %s292
      %p301 = scmp.eq.s32.totalorder %s27, 1
      %p302 = por %p300, %p301
      %p303 = scmp.ne.s32.totalorder %s292, %s293
      %p304 = scmp.eq.s32.totalorder %s27, 0
      %p305 = por %p303, %p304
      %p306 = scmp.ne.s32.totalorder %s292, %s293
      %p307 = scmp.eq.s32.totalorder %s28, 1
      %p308 = por %p306, %p307
      %p310 = scmp.ne.s32.totalorder %s293, %s309
      %p311 = scmp.eq.s32.totalorder %s28, 0
      %p312 = por %p310, %p311
      %p313 = scmp.le.s32.totalorder 1, %s22
      %p314 = scmp.lt.s32.totalorder %s22, 3
      %p315 = pnand %p313, %p314
      %p316 = pneg %p315
      // Predicated region
      $region9: #{tpu_custom_call.1} parent=5 // pred_check
        _
      $region10: #{tpu_custom_call.1} parent=5 // pred_check_branch
        %318 = sbr.rel (%p315) target = $region12
      $region11: #{tpu_custom_call.1} parent=5 // pred_region
        %s319 = ssub.s32 %s22, 1
        // Predicated region
        $region13: #{tpu_custom_call.1} parent=11 // pred_check
          %p320 = pneg %p69
        $region14: #{tpu_custom_call.1} parent=11 // pred_check_branch
          %322 = sbr.rel (%p320) target = $region16
        $region15: #{tpu_custom_call.1} parent=11 // pred_region
          _
        $region16: #{tpu_custom_call.1} parent=11 // pred_fallthru
          _
        // Predicated region
        $region17: #{tpu_custom_call.1} parent=11 // pred_check
          %p323 = pneg %p90
        $region18: #{tpu_custom_call.1} parent=11 // pred_check_branch
          %325 = sbr.rel (%p323) target = $region20
        $region19: #{tpu_custom_call.1} parent=11 // pred_region
          _
        $region20: #{tpu_custom_call.1} parent=11 // pred_fallthru
          _
        // Predicated region
        $region21: #{tpu_custom_call.1} parent=11 // pred_check
          %p326 = pneg %p111
        $region22: #{tpu_custom_call.1} parent=11 // pred_check_branch
          %328 = sbr.rel (%p326) target = $region24
        $region23: #{tpu_custom_call.1} parent=11 // pred_region
          _
        $region24: #{tpu_custom_call.1} parent=11 // pred_fallthru
          _
        // Predicated region
        $region25: #{tpu_custom_call.1} parent=11 // pred_check
          %p329 = pneg %p132
        $region26: #{tpu_custom_call.1} parent=11 // pred_check_branch
          %331 = sbr.rel (%p329) target = $region28
        $region27: #{tpu_custom_call.1} parent=11 // pred_region
          _
        $region28: #{tpu_custom_call.1} parent=11 // pred_fallthru
          _
        // Predicated region
        $region29: #{tpu_custom_call.1} parent=11 // pred_check
          %p332 = pneg %p153
        $region30: #{tpu_custom_call.1} parent=11 // pred_check_branch
          %334 = sbr.rel (%p332) target = $region32
        $region31: #{tpu_custom_call.1} parent=11 // pred_region
          _
        $region32: #{tpu_custom_call.1} parent=11 // pred_fallthru
          _
        // Predicated region
        $region33: #{tpu_custom_call.1} parent=11 // pred_check
          %p335 = pneg %p174
        $region34: #{tpu_custom_call.1} parent=11 // pred_check_branch
          %337 = sbr.rel (%p335) target = $region36
        $region35: #{tpu_custom_call.1} parent=11 // pred_region
          _
        $region36: #{tpu_custom_call.1} parent=11 // pred_fallthru
          _
        // Predicated region
        $region37: #{tpu_custom_call.1} parent=11 // pred_check
          %p338 = pneg %p195
        $region38: #{tpu_custom_call.1} parent=11 // pred_check_branch
          %340 = sbr.rel (%p338) target = $region40
        $region39: #{tpu_custom_call.1} parent=11 // pred_region
          _
        $region40: #{tpu_custom_call.1} parent=11 // pred_fallthru
          _
        // Predicated region
        $region41: #{tpu_custom_call.1} parent=11 // pred_check
          %p341 = pneg %p216
        $region42: #{tpu_custom_call.1} parent=11 // pred_check_branch
          %343 = sbr.rel (%p341) target = $region44
        $region43: #{tpu_custom_call.1} parent=11 // pred_region
          %s345 = ssub.s32 256, 256
          %346 = vsyncadd [#allocation4], %s345
          %s347 = sshll.u32 [#allocation3], 4
          %s348 = int_to_ptr.vmem [resolvable:$true] %s347
          %353 = dma.hbm_to_vmem [thread:$0]  %s8, 256, %s348, [#allocation4], 64, 64, 4
        $region44: #{tpu_custom_call.1} parent=11 // pred_fallthru
          _
        // Predicated region
        $region45: #{tpu_custom_call.1} parent=11 // pred_check
          %p354 = pneg %p237
        $region46: #{tpu_custom_call.1} parent=11 // pred_check_branch
          %356 = sbr.rel (%p354) target = $region48
        $region47: #{tpu_custom_call.1} parent=11 // pred_region
          _
        $region48: #{tpu_custom_call.1} parent=11 // pred_fallthru
          _
        // Predicated region
        $region49: #{tpu_custom_call.1} parent=11 // pred_check
          %p357 = pneg %p258
        $region50: #{tpu_custom_call.1} parent=11 // pred_check_branch
          %359 = sbr.rel (%p357) target = $region52
        $region51: #{tpu_custom_call.1} parent=11 // pred_region
          _
        $region52: #{tpu_custom_call.1} parent=11 // pred_fallthru
          _
        // Predicated region
        $region53: #{tpu_custom_call.1} parent=11 // pred_check
          %p360 = pneg %p279
        $region54: #{tpu_custom_call.1} parent=11 // pred_check_branch
          %362 = sbr.rel (%p360) target = $region56
        $region55: #{tpu_custom_call.1} parent=11 // pred_region
          _
        $region56: #{tpu_custom_call.1} parent=11 // pred_fallthru
          _
      $region12: #{tpu_custom_call.1} parent=5 // pred_fallthru
        _
      %p363 = scmp.lt.s32.totalorder %s22, 2
      // Predicated region
      $region57: #{tpu_custom_call.1} parent=5 // pred_check
        %p364 = pneg %p363
      $region58: #{tpu_custom_call.1} parent=5 // pred_check_branch
        %366 = sbr.rel (%p364) target = $region60
      $region59: #{tpu_custom_call.1} parent=5 // pred_region
        // Predicated region
        $region61: #{tpu_custom_call.1} parent=59 // pred_check
          %p367 = pneg %p42
        $region62: #{tpu_custom_call.1} parent=59 // pred_check_branch
          %369 = sbr.rel (%p367) target = $region64
        $region63: #{tpu_custom_call.1} parent=59 // pred_region
          %p370 = scmp.lt.s32.totalorder %s22, 1
          %s371 = scalar_select %p370, %s22, 1
          %s372 = smul.addr %s371, 8
          %s373 = scalar_lea.vmem %s0, %s372
        $region64: #{tpu_custom_call.1} parent=59 // pred_fallthru
          _
      $region60: #{tpu_custom_call.1} parent=5 // pred_fallthru
        _
      %p374 = scmp.le.s32.totalorder 1, %s22
      %p375 = scmp.lt.s32.totalorder %s22, 3
      %p376 = pnand %p374, %p375
      %p377 = pneg %p376
      // Predicated region
      $region65: #{tpu_custom_call.1} parent=5 // pred_check
        _
      $region66: #{tpu_custom_call.1} parent=5 // pred_check_branch
        %379 = sbr.rel (%p376) target = $region68
      $region67: #{tpu_custom_call.1} parent=5 // pred_region
        %s380 = ssub.s32 %s22, 1
        // Predicated region
        $region69: #{tpu_custom_call.1} parent=67 // pred_check
          %p381 = pneg %p216
        $region70: #{tpu_custom_call.1} parent=67 // pred_check_branch
          %383 = sbr.rel (%p381) target = $region72
        $region71: #{tpu_custom_call.1} parent=67 // pred_region
          %384 = dma.done [#allocation4], 256
        $region72: #{tpu_custom_call.1} parent=67 // pred_fallthru
          _
        %p385 = scmp.lt.s32.totalorder %s27, 1
        %s386 = scalar_select %p385, %s27, 1
        %s387 = smul.addr %s386, 8
        %s388 = scalar_lea.vmem %s0, %s387
        %p389 = pneg %p48
        %p390 = pneg %p45
        %p391 = pneg %p69
        %p392 = pneg %p66
        %p393 = pneg %p90
        %p394 = pneg %p87
        %p395 = pneg %p111
        %p396 = pneg %p108
        %p397 = pneg %p132
        %p398 = pneg %p129
        %p399 = pneg %p153
        %p400 = pneg %p150
        %p401 = pneg %p174
        %p402 = pneg %p171
        %p403 = pneg %p195
        %p404 = pneg %p192
        %p405 = pneg %p216
        %p406 = pneg %p213
        %p407 = pneg %p237
        %p408 = pneg %p234
        %p409 = pneg %p258
        %p410 = pneg %p255
        %p411 = pneg %p279
        %p412 = pneg %p276
        %p413 = pneg %p305
        %p414 = pneg %p302
        %s415 = sand.u32 %s292, 1
        %s416 = scalar_lea.sflag [#allocation5], %s415
        %s417 = sand.u32 %s292, 1
        %s418 = smul.addr %s417, 8
        %s419 = scalar_lea.vmem [#allocation6], %s418
        %p420 = scmp.lt.s32.totalorder %s27, 1
        %s421 = scalar_select %p420, %s27, 1
        %s422 = smul.addr %s421, 8
        %s423 = scalar_lea.vmem %s0, %s422
        %v425 = vld [vmem:[%s423] sm:$0xff]
        %v426 = vld [vmem:[%s1] sm:$0x1]
        %v427 = vld [vmem:[%s2] sm:$0x1]
        %vm428 = vcmask 261120
        %v429 = vsel %vm428, %v425, 0.0
        %430 = vadd.xlane.f32.xlu0 %v429
        %v431 = vpop.xlane.xlu0 %430
        %v432 = vrcp.pop 32.0
        %v433 = vmul.f32 %v431, %v432
        %v434 = vsub.f32 %v425, %v433
        %v435 = vmul.f32 %v434, %v434
        %v436 = vsel %vm428, %v435, 0.0
        %437 = vadd.xlane.f32.xlu0 %v436
        %v438 = vpop.xlane.xlu0 %437
        %v439 = vmul.f32 %v438, %v432
        %v440 = vadd.f32 %v439, 1e-06
        %v441 = vrsqrt.pop %v440
        %v442 = vmul.f32 %v434, %v441
        %v444 = vlaneseq
        %v445 = vshrl.u32 %v444, 7
        %v446 = vsub.s32 0, %v445
        %v447 = vrot.slane %v426, %v446
        %v449 = vmul.f32 %v442, %v447
        %v451 = vlaneseq
        %v452 = vshrl.u32 %v451, 7
        %v453 = vsub.s32 0, %v452
        %v454 = vrot.slane %v427, %v453
        %v456 = vadd.f32 %v449, %v454
        %v457 = vpack.c.bf16 %v456, %v456
        %v458 = vld [vmem:[%s3] sm:$0xf]
        %v459 = vld [vmem:[%s3 + $0x4] sm:$0xf]
        %v460 = vld [vmem:[%s3 + $0x8] sm:$0xf]
        %v461 = vld [vmem:[%s3 + $0xc] sm:$0xf]
        %v466 = vunpack.c.l.b16 %v458
        %v467 = vunpack.c.l.b16 %v459
        %v468 = vunpack.c.l.b16 %v460
        %v469 = vunpack.c.l.b16 %v461
        %v470 = vpack.c.b16 %v467, %v466
        %v471 = vpack.c.b16 %v469, %v468
        %v475 = vsel %vm428, %v457, 0
        %477 = vmatprep.subr.bf16.mxu0 0
        %478 = vmatpush1.bf16.msra.mxu0 %v470
        %479 = vmatprep.subr.bf16.mxu0 0
        %480 = vmatpush1.bf16.msra.mxu0 %v471
        %481 = vmatprep.subr.bf16.mxu0 0
        %482 = vmatpush1.bf16.msra.mxu0 0
        %483 = vmatprep.subr.bf16.mxu0 0
        %484 = vmatpush1.bf16.msra.mxu0 0
        %485 = vmatprep.subr.bf16.mxu0 0
        %486 = vmatpush1.bf16.msra.mxu0 0
        %487 = vmatprep.subr.bf16.mxu0 0
        %488 = vmatpush1.bf16.msra.mxu0 0
        %489 = vmatprep.subr.bf16.mxu0 0
        %490 = vmatpush1.bf16.msra.mxu0 0
        %491 = vmatprep.subr.bf16.mxu0 0
        %492 = vmatpush1.bf16.msra.mxu0 0
        %493 = vmatprep.subr.bf16.mxu0 0
        %494 = vmatpush1.bf16.msra.mxu0 0
        %495 = vmatprep.subr.bf16.mxu0 0
        %496 = vmatpush1.bf16.msra.mxu0 0
        %497 = vmatprep.subr.bf16.mxu0 0
        %498 = vmatpush1.bf16.msra.mxu0 0
        %499 = vmatprep.subr.bf16.mxu0 0
        %500 = vmatpush1.bf16.msra.mxu0 0
        %501 = vmatprep.subr.bf16.mxu0 0
        %502 = vmatpush1.bf16.msra.mxu0 0
        %503 = vmatprep.subr.bf16.mxu0 0
        %504 = vmatpush1.bf16.msra.mxu0 0
        %505 = vmatprep.subr.bf16.mxu0 0
        %506 = vmatpush1.bf16.msra.mxu0 0
        %507 = vmatprep.subr.bf16.mxu0 0
        %508 = vmatpush1.bf16.msra.mxu0 0
        %509 = vmatprep.mubr.bf16.mxu0 0
        %510 = vmatmul.mubr.bf16.gmra.mrb[0].mxu0 %v475
        %v511 = vpop.f32.mrb[0].mxu0
        %v512 = vadd.f32 0.0, %v511
        %v513 = vpop.f32.mrb[0].mxu0
        %v514 = vpop.f32.mrb[0].mxu0
        %v515 = vpop.f32.mrb[0].mxu0
        %516 = vdwg.mxu0
        %v517 = vmul.f32 %v512, 0.35355338
        %v518 = vpack.c.bf16 %v517, %v517
        %v519 = vpack.c.bf16 %v512, %v512
        %521 = vrot.lane.b32.xlu0 %v519, 96
        %v522 = vpop.permute.xlu0 %521
        %vm523 = vcmask 64512
        %v525 = vsel %vm523, %v518, 0
        %v528 = vsel %vm523, %v522, 0
        %530 = vmatprep.subr.bf16.mxu0 0
        %531 = vmatpush1.bf16.xpose.msra.mxu0 %v528
        %532 = vmatprep.subr.bf16.mxu0 0
        %533 = vmatpush1.bf16.xpose.msra.mxu0 0
        %534 = vmatprep.subr.bf16.mxu0 0
        %535 = vmatpush1.bf16.xpose.msra.mxu0 0
        %536 = vmatprep.subr.bf16.mxu0 0
        %537 = vmatpush1.bf16.xpose.msra.mxu0 0
        %538 = vmatprep.subr.bf16.mxu0 0
        %539 = vmatpush1.bf16.xpose.msra.mxu0 0
        %540 = vmatprep.subr.bf16.mxu0 0
        %541 = vmatpush1.bf16.xpose.msra.mxu0 0
        %542 = vmatprep.subr.bf16.mxu0 0
        %543 = vmatpush1.bf16.xpose.msra.mxu0 0
        %544 = vmatprep.subr.bf16.mxu0 0
        %545 = vmatpush1.bf16.xpose.msra.mxu0 0
        %546 = vmatprep.subr.bf16.mxu0 0
        %547 = vmatpush1.bf16.xpose.msra.mxu0 0
        %548 = vmatprep.subr.bf16.mxu0 0
        %549 = vmatpush1.bf16.xpose.msra.mxu0 0
        %550 = vmatprep.subr.bf16.mxu0 0
        %551 = vmatpush1.bf16.xpose.msra.mxu0 0
        %552 = vmatprep.subr.bf16.mxu0 0
        %553 = vmatpush1.bf16.xpose.msra.mxu0 0
        %554 = vmatprep.subr.bf16.mxu0 0
        %555 = vmatpush1.bf16.xpose.msra.mxu0 0
        %556 = vmatprep.subr.bf16.mxu0 0
        %557 = vmatpush1.bf16.xpose.msra.mxu0 0
        %558 = vmatprep.subr.bf16.mxu0 0
        %559 = vmatpush1.bf16.xpose.msra.mxu0 0
        %560 = vmatprep.subr.bf16.mxu0 0
        %561 = vmatpush1.bf16.xpose.msra.mxu0 0
        %562 = vmatprep.mubr.bf16.mxu0 0
        %563 = vmatmul.mubr.bf16.gmra.mrb[0].mxu0 %v525
        %v564 = vpop.f32.mrb[0].mxu0
        %v565 = vadd.f32 0.0, %v564
        %v566 = vpop.f32.mrb[0].mxu0
        %v567 = vpop.f32.mrb[0].mxu0
        %v568 = vpop.f32.mrb[0].mxu0
        %569 = vdwg.mxu0
        %v570 = vsel %vm523, %v565, -inf
        %571 = vmax.xlane.f32.xlu0 %v570
        %v572 = vpop.xlane.xlu0 %571
        %v573 = vsub.f32 %v565, %v572
        %v574 = vmul.f32 %v573, 1.442695
        %v575 = vpow.pop %v574
        %v576 = vsel %vm523, %v575, 0.0
        %577 = vadd.xlane.f32.xlu0 %v576
        %v578 = vpop.xlane.xlu0 %577
        %v579 = vrcp.pop %v578
        %v580 = vmul.f32 %v575, %v579
        %v581 = vpack.c.bf16 %v580, %v580
        %582 = vrot.lane.b32.xlu0 %v519, 64
        %v583 = vpop.permute.xlu0 %582
        %v585 = vsel %vm523, %v581, 0
        %vm587 = vcmask 1043456
        %v589 = vsel %vm587, %v583, 0
        %591 = vmatprep.subr.bf16.mxu0 0
        %592 = vmatpush1.bf16.msra.mxu0 %v589
        %593 = vmatprep.subr.bf16.mxu0 0
        %594 = vmatpush1.bf16.msra.mxu0 0
        %595 = vmatprep.subr.bf16.mxu0 0
        %596 = vmatpush1.bf16.msra.mxu0 0
        %597 = vmatprep.subr.bf16.mxu0 0
        %598 = vmatpush1.bf16.msra.mxu0 0
        %599 = vmatprep.subr.bf16.mxu0 0
        %600 = vmatpush1.bf16.msra.mxu0 0
        %601 = vmatprep.subr.bf16.mxu0 0
        %602 = vmatpush1.bf16.msra.mxu0 0
        %603 = vmatprep.subr.bf16.mxu0 0
        %604 = vmatpush1.bf16.msra.mxu0 0
        %605 = vmatprep.subr.bf16.mxu0 0
        %606 = vmatpush1.bf16.msra.mxu0 0
        %607 = vmatprep.subr.bf16.mxu0 0
        %608 = vmatpush1.bf16.msra.mxu0 0
        %609 = vmatprep.subr.bf16.mxu0 0
        %610 = vmatpush1.bf16.msra.mxu0 0
        %611 = vmatprep.subr.bf16.mxu0 0
        %612 = vmatpush1.bf16.msra.mxu0 0
        %613 = vmatprep.subr.bf16.mxu0 0
        %614 = vmatpush1.bf16.msra.mxu0 0
        %615 = vmatprep.subr.bf16.mxu0 0
        %616 = vmatpush1.bf16.msra.mxu0 0
        %617 = vmatprep.subr.bf16.mxu0 0
        %618 = vmatpush1.bf16.msra.mxu0 0
        %619 = vmatprep.subr.bf16.mxu0 0
        %620 = vmatpush1.bf16.msra.mxu0 0
        %621 = vmatprep.subr.bf16.mxu0 0
        %622 = vmatpush1.bf16.msra.mxu0 0
        %623 = vmatprep.mubr.bf16.mxu0 0
        %624 = vmatmul.mubr.bf16.gmra.mrb[0].mxu0 %v585
        %v625 = vpop.f32.mrb[0].mxu0
        %v626 = vadd.f32 0.0, %v625
        %v627 = vpop.f32.mrb[0].mxu0
        %v628 = vpop.f32.mrb[0].mxu0
        %v629 = vpop.f32.mrb[0].mxu0
        %630 = vdwg.mxu0
        %v631 = vpack.c.bf16 %v626, %v626
        %vm632 = vcmask 60416
        %633 = vst.msk [vmem:[#allocation2] sm:$0xf] %vm632, %v631
        %635 = vrot.lane.b32.xlu0 %v518, 120
        %v636 = vpop.permute.xlu0 %635
        %637 = vrot.lane.b32.xlu0 %v519, 88
        %v638 = vpop.permute.xlu0 %637
        %v640 = vsel %vm523, %v636, 0
        %v643 = vsel %vm523, %v638, 0
        %645 = vmatprep.subr.bf16.mxu0 0
        %646 = vmatpush1.bf16.xpose.msra.mxu0 %v643
        %647 = vmatprep.subr.bf16.mxu0 0
        %648 = vmatpush1.bf16.xpose.msra.mxu0 0
        %649 = vmatprep.subr.bf16.mxu0 0
        %650 = vmatpush1.bf16.xpose.msra.mxu0 0
        %651 = vmatprep.subr.bf16.mxu0 0
        %652 = vmatpush1.bf16.xpose.msra.mxu0 0
        %653 = vmatprep.subr.bf16.mxu0 0
        %654 = vmatpush1.bf16.xpose.msra.mxu0 0
        %655 = vmatprep.subr.bf16.mxu0 0
        %656 = vmatpush1.bf16.xpose.msra.mxu0 0
        %657 = vmatprep.subr.bf16.mxu0 0
        %658 = vmatpush1.bf16.xpose.msra.mxu0 0
        %659 = vmatprep.subr.bf16.mxu0 0
        %660 = vmatpush1.bf16.xpose.msra.mxu0 0
        %661 = vmatprep.subr.bf16.mxu0 0
        %662 = vmatpush1.bf16.xpose.msra.mxu0 0
        %663 = vmatprep.subr.bf16.mxu0 0
        %664 = vmatpush1.bf16.xpose.msra.mxu0 0
        %665 = vmatprep.subr.bf16.mxu0 0
        %666 = vmatpush1.bf16.xpose.msra.mxu0 0
        %667 = vmatprep.subr.bf16.mxu0 0
        %668 = vmatpush1.bf16.xpose.msra.mxu0 0
        %669 = vmatprep.subr.bf16.mxu0 0
        %670 = vmatpush1.bf16.xpose.msra.mxu0 0
        %671 = vmatprep.subr.bf16.mxu0 0
        %672 = vmatpush1.bf16.xpose.msra.mxu0 0
        %673 = vmatprep.subr.bf16.mxu0 0
        %674 = vmatpush1.bf16.xpose.msra.mxu0 0
        %675 = vmatprep.subr.bf16.mxu0 0
        %676 = vmatpush1.bf16.xpose.msra.mxu0 0
        %677 = vmatprep.mubr.bf16.mxu0 0
        %678 = vmatmul.mubr.bf16.gmra.mrb[0].mxu0 %v640
        %v679 = vpop.f32.mrb[0].mxu0
        %v680 = vadd.f32 0.0, %v679
        %v681 = vpop.f32.mrb[0].mxu0
        %v682 = vpop.f32.mrb[0].mxu0
        %v683 = vpop.f32.mrb[0].mxu0
        %684 = vdwg.mxu0
        %v685 = vsel %vm523, %v680, -inf
        %686 = vmax.xlane.f32.xlu0 %v685
        %v687 = vpop.xlane.xlu0 %686
        %v688 = vsub.f32 %v680, %v687
        %v689 = vmul.f32 %v688, 1.442695
        %v690 = vpow.pop %v689
        %v691 = vsel %vm523, %v690, 0.0
        %692 = vadd.xlane.f32.xlu0 %v691
        %v693 = vpop.xlane.xlu0 %692
        %v694 = vrcp.pop %v693
        %v695 = vmul.f32 %v690, %v694
        %v696 = vpack.c.bf16 %v695, %v695
        %697 = vrot.lane.b32.xlu0 %v519, 56
        %v698 = vpop.permute.xlu0 %697
        %v700 = vsel %vm523, %v696, 0
        %v703 = vsel %vm587, %v698, 0
        %705 = vmatprep.subr.bf16.mxu0 0
        %706 = vmatpush1.bf16.msra.mxu0 %v703
        %707 = vmatprep.subr.bf16.mxu0 0
        %708 = vmatpush1.bf16.msra.mxu0 0
        %709 = vmatprep.subr.bf16.mxu0 0
        %710 = vmatpush1.bf16.msra.mxu0 0
        %711 = vmatprep.subr.bf16.mxu0 0
        %712 = vmatpush1.bf16.msra.mxu0 0
        %713 = vmatprep.subr.bf16.mxu0 0
        %714 = vmatpush1.bf16.msra.mxu0 0
        %715 = vmatprep.subr.bf16.mxu0 0
        %716 = vmatpush1.bf16.msra.mxu0 0
        %717 = vmatprep.subr.bf16.mxu0 0
        %718 = vmatpush1.bf16.msra.mxu0 0
        %719 = vmatprep.subr.bf16.mxu0 0
        %720 = vmatpush1.bf16.msra.mxu0 0
        %721 = vmatprep.subr.bf16.mxu0 0
        %722 = vmatpush1.bf16.msra.mxu0 0
        %723 = vmatprep.subr.bf16.mxu0 0
        %724 = vmatpush1.bf16.msra.mxu0 0
        %725 = vmatprep.subr.bf16.mxu0 0
        %726 = vmatpush1.bf16.msra.mxu0 0
        %727 = vmatprep.subr.bf16.mxu0 0
        %728 = vmatpush1.bf16.msra.mxu0 0
        %729 = vmatprep.subr.bf16.mxu0 0
        %730 = vmatpush1.bf16.msra.mxu0 0
        %731 = vmatprep.subr.bf16.mxu0 0
        %732 = vmatpush1.bf16.msra.mxu0 0
        %733 = vmatprep.subr.bf16.mxu0 0
        %734 = vmatpush1.bf16.msra.mxu0 0
        %735 = vmatprep.subr.bf16.mxu0 0
        %736 = vmatpush1.bf16.msra.mxu0 0
        %737 = vmatprep.mubr.bf16.mxu0 0
        %738 = vmatmul.mubr.bf16.gmra.mrb[0].mxu0 %v700
        %v739 = vpop.f32.mrb[0].mxu0
        %v740 = vadd.f32 0.0, %v739
        %v741 = vpop.f32.mrb[0].mxu0
        %v742 = vpop.f32.mrb[0].mxu0
        %v743 = vpop.f32.mrb[0].mxu0
        %744 = vdwg.mxu0
        %v745 = vpack.c.bf16 %v740, %v740
        %v747 = vunpack.c.l.b16 %v745
        %v748 = vpack.c.b16 %v747, %v747
        %749 = vrot.lane.b32.xlu0 %v748, 8
        %v750 = vpop.permute.xlu0 %749
        %vm752 = vcmask 126016
        %753 = vst.msk [vmem:[#allocation2] sm:$0xf] %vm752, %v750
        %754 = vrot.lane.b32.xlu0 %v518, 112
        %v755 = vpop.permute.xlu0 %754
        %756 = vrot.lane.b32.xlu0 %v519, 80
        %v757 = vpop.permute.xlu0 %756
        %v759 = vsel %vm523, %v755, 0
        %v762 = vsel %vm523, %v757, 0
        %764 = vmatprep.subr.bf16.mxu0 0
        %765 = vmatpush1.bf16.xpose.msra.mxu0 %v762
        %766 = vmatprep.subr.bf16.mxu0 0
        %767 = vmatpush1.bf16.xpose.msra.mxu0 0
        %768 = vmatprep.subr.bf16.mxu0 0
        %769 = vmatpush1.bf16.xpose.msra.mxu0 0
        %770 = vmatprep.subr.bf16.mxu0 0
        %771 = vmatpush1.bf16.xpose.msra.mxu0 0
        %772 = vmatprep.subr.bf16.mxu0 0
        %773 = vmatpush1.bf16.xpose.msra.mxu0 0
        %774 = vmatprep.subr.bf16.mxu0 0
        %775 = vmatpush1.bf16.xpose.msra.mxu0 0
        %776 = vmatprep.subr.bf16.mxu0 0
        %777 = vmatpush1.bf16.xpose.msra.mxu0 0
        %778 = vmatprep.subr.bf16.mxu0 0
        %779 = vmatpush1.bf16.xpose.msra.mxu0 0
        %780 = vmatprep.subr.bf16.mxu0 0
        %781 = vmatpush1.bf16.xpose.msra.mxu0 0
        %782 = vmatprep.subr.bf16.mxu0 0
        %783 = vmatpush1.bf16.xpose.msra.mxu0 0
        %784 = vmatprep.subr.bf16.mxu0 0
        %785 = vmatpush1.bf16.xpose.msra.mxu0 0
        %786 = vmatprep.subr.bf16.mxu0 0
        %787 = vmatpush1.bf16.xpose.msra.mxu0 0
        %788 = vmatprep.subr.bf16.mxu0 0
        %789 = vmatpush1.bf16.xpose.msra.mxu0 0
        %790 = vmatprep.subr.bf16.mxu0 0
        %791 = vmatpush1.bf16.xpose.msra.mxu0 0
        %792 = vmatprep.subr.bf16.mxu0 0
        %793 = vmatpush1.bf16.xpose.msra.mxu0 0
        %794 = vmatprep.subr.bf16.mxu0 0
        %795 = vmatpush1.bf16.xpose.msra.mxu0 0
        %796 = vmatprep.mubr.bf16.mxu0 0
        %797 = vmatmul.mubr.bf16.gmra.mrb[0].mxu0 %v759
        %v798 = vpop.f32.mrb[0].mxu0
        %v799 = vadd.f32 0.0, %v798
        %v800 = vpop.f32.mrb[0].mxu0
        %v801 = vpop.f32.mrb[0].mxu0
        %v802 = vpop.f32.mrb[0].mxu0
        %803 = vdwg.mxu0
        %v804 = vsel %vm523, %v799, -inf
        %805 = vmax.xlane.f32.xlu0 %v804
        %v806 = vpop.xlane.xlu0 %805
        %v807 = vsub.f32 %v799, %v806
        %v808 = vmul.f32 %v807, 1.442695
        %v809 = vpow.pop %v808
        %v810 = vsel %vm523, %v809, 0.0
        %811 = vadd.xlane.f32.xlu0 %v810
        %v812 = vpop.xlane.xlu0 %811
        %v813 = vrcp.pop %v812
        %v814 = vmul.f32 %v809, %v813
        %v815 = vpack.c.bf16 %v814, %v814
        %816 = vrot.lane.b32.xlu0 %v519, 48
        %v817 = vpop.permute.xlu0 %816
        %v819 = vsel %vm523, %v815, 0
        %v822 = vsel %vm587, %v817, 0
        %824 = vmatprep.subr.bf16.mxu0 0
        %825 = vmatpush1.bf16.msra.mxu0 %v822
        %826 = vmatprep.subr.bf16.mxu0 0
        %827 = vmatpush1.bf16.msra.mxu0 0
        %828 = vmatprep.subr.bf16.mxu0 0
        %829 = vmatpush1.bf16.msra.mxu0 0
        %830 = vmatprep.subr.bf16.mxu0 0
        %831 = vmatpush1.bf16.msra.mxu0 0
        %832 = vmatprep.subr.bf16.mxu0 0
        %833 = vmatpush1.bf16.msra.mxu0 0
        %834 = vmatprep.subr.bf16.mxu0 0
        %835 = vmatpush1.bf16.msra.mxu0 0
        %836 = vmatprep.subr.bf16.mxu0 0
        %837 = vmatpush1.bf16.msra.mxu0 0
        %838 = vmatprep.subr.bf16.mxu0 0
        %839 = vmatpush1.bf16.msra.mxu0 0
        %840 = vmatprep.subr.bf16.mxu0 0
        %841 = vmatpush1.bf16.msra.mxu0 0
        %842 = vmatprep.subr.bf16.mxu0 0
        %843 = vmatpush1.bf16.msra.mxu0 0
        %844 = vmatprep.subr.bf16.mxu0 0
        %845 = vmatpush1.bf16.msra.mxu0 0
        %846 = vmatprep.subr.bf16.mxu0 0
        %847 = vmatpush1.bf16.msra.mxu0 0
        %848 = vmatprep.subr.bf16.mxu0 0
        %849 = vmatpush1.bf16.msra.mxu0 0
        %850 = vmatprep.subr.bf16.mxu0 0
        %851 = vmatpush1.bf16.msra.mxu0 0
        %852 = vmatprep.subr.bf16.mxu0 0
        %853 = vmatpush1.bf16.msra.mxu0 0
        %854 = vmatprep.subr.bf16.mxu0 0
        %855 = vmatpush1.bf16.msra.mxu0 0
        %856 = vmatprep.mubr.bf16.mxu0 0
        %857 = vmatmul.mubr.bf16.gmra.mrb[0].mxu0 %v819
        %v858 = vpop.f32.mrb[0].mxu0
        %v859 = vadd.f32 0.0, %v858
        %v860 = vpop.f32.mrb[0].mxu0
        %v861 = vpop.f32.mrb[0].mxu0
        %v862 = vpop.f32.mrb[0].mxu0
        %863 = vdwg.mxu0
        %v864 = vpack.c.bf16 %v859, %v859
        %v866 = vunpack.c.l.b16 %v864
        %v867 = vpack.c.b16 %v866, %v866
        %868 = vrot.lane.b32.xlu0 %v867, 16
        %v869 = vpop.permute.xlu0 %868
        %vm871 = vcmask 191616
        %872 = vst.msk [vmem:[#allocation2] sm:$0xf] %vm871, %v869
        %873 = vrot.lane.b32.xlu0 %v518, 104
        %v874 = vpop.permute.xlu0 %873
        %875 = vrot.lane.b32.xlu0 %v519, 72
        %v876 = vpop.permute.xlu0 %875
        %v878 = vsel %vm523, %v874, 0
        %v881 = vsel %vm523, %v876, 0
        %883 = vmatprep.subr.bf16.mxu0 0
        %884 = vmatpush1.bf16.xpose.msra.mxu0 %v881
        %885 = vmatprep.subr.bf16.mxu0 0
        %886 = vmatpush1.bf16.xpose.msra.mxu0 0
        %887 = vmatprep.subr.bf16.mxu0 0
        %888 = vmatpush1.bf16.xpose.msra.mxu0 0
        %889 = vmatprep.subr.bf16.mxu0 0
        %890 = vmatpush1.bf16.xpose.msra.mxu0 0
        %891 = vmatprep.subr.bf16.mxu0 0
        %892 = vmatpush1.bf16.xpose.msra.mxu0 0
        %893 = vmatprep.subr.bf16.mxu0 0
        %894 = vmatpush1.bf16.xpose.msra.mxu0 0
        %895 = vmatprep.subr.bf16.mxu0 0
        %896 = vmatpush1.bf16.xpose.msra.mxu0 0
        %897 = vmatprep.subr.bf16.mxu0 0
        %898 = vmatpush1.bf16.xpose.msra.mxu0 0
        %899 = vmatprep.subr.bf16.mxu0 0
        %900 = vmatpush1.bf16.xpose.msra.mxu0 0
        %901 = vmatprep.subr.bf16.mxu0 0
        %902 = vmatpush1.bf16.xpose.msra.mxu0 0
        %903 = vmatprep.subr.bf16.mxu0 0
        %904 = vmatpush1.bf16.xpose.msra.mxu0 0
        %905 = vmatprep.subr.bf16.mxu0 0
        %906 = vmatpush1.bf16.xpose.msra.mxu0 0
        %907 = vmatprep.subr.bf16.mxu0 0
        %908 = vmatpush1.bf16.xpose.msra.mxu0 0
        %909 = vmatprep.subr.bf16.mxu0 0
        %910 = vmatpush1.bf16.xpose.msra.mxu0 0
        %911 = vmatprep.subr.bf16.mxu0 0
        %912 = vmatpush1.bf16.xpose.msra.mxu0 0
        %913 = vmatprep.subr.bf16.mxu0 0
        %914 = vmatpush1.bf16.xpose.msra.mxu0 0
        %915 = vmatprep.mubr.bf16.mxu0 0
        %916 = vmatmul.mubr.bf16.gmra.mrb[0].mxu0 %v878
        %v917 = vpop.f32.mrb[0].mxu0
        %v918 = vadd.f32 0.0, %v917
        %v919 = vpop.f32.mrb[0].mxu0
        %v920 = vpop.f32.mrb[0].mxu0
        %v921 = vpop.f32.mrb[0].mxu0
        %922 = vdwg.mxu0
        %v923 = vsel %vm523, %v918, -inf
        %924 = vmax.xlane.f32.xlu0 %v923
        %v925 = vpop.xlane.xlu0 %924
        %v926 = vsub.f32 %v918, %v925
        %v927 = vmul.f32 %v926, 1.442695
        %v928 = vpow.pop %v927
        %v929 = vsel %vm523, %v928, 0.0
        %930 = vadd.xlane.f32.xlu0 %v929
        %v931 = vpop.xlane.xlu0 %930
        %v932 = vrcp.pop %v931
        %v933 = vmul.f32 %v928, %v932
        %v934 = vpack.c.bf16 %v933, %v933
        %935 = vrot.lane.b32.xlu0 %v519, 40
        %v936 = vpop.permute.xlu0 %935
        %v938 = vsel %vm523, %v934, 0
        %v941 = vsel %vm587, %v936, 0
        %943 = vmatprep.subr.bf16.mxu0 0
        %944 = vmatpush1.bf16.msra.mxu0 %v941
        %945 = vmatprep.subr.bf16.mxu0 0
        %946 = vmatpush1.bf16.msra.mxu0 0
        %947 = vmatprep.subr.bf16.mxu0 0
        %948 = vmatpush1.bf16.msra.mxu0 0
        %949 = vmatprep.subr.bf16.mxu0 0
        %950 = vmatpush1.bf16.msra.mxu0 0
        %951 = vmatprep.subr.bf16.mxu0 0
        %952 = vmatpush1.bf16.msra.mxu0 0
        %953 = vmatprep.subr.bf16.mxu0 0
        %954 = vmatpush1.bf16.msra.mxu0 0
        %955 = vmatprep.subr.bf16.mxu0 0
        %956 = vmatpush1.bf16.msra.mxu0 0
        %957 = vmatprep.subr.bf16.mxu0 0
        %958 = vmatpush1.bf16.msra.mxu0 0
        %959 = vmatprep.subr.bf16.mxu0 0
        %960 = vmatpush1.bf16.msra.mxu0 0
        %961 = vmatprep.subr.bf16.mxu0 0
        %962 = vmatpush1.bf16.msra.mxu0 0
        %963 = vmatprep.subr.bf16.mxu0 0
        %964 = vmatpush1.bf16.msra.mxu0 0
        %965 = vmatprep.subr.bf16.mxu0 0
        %966 = vmatpush1.bf16.msra.mxu0 0
        %967 = vmatprep.subr.bf16.mxu0 0
        %968 = vmatpush1.bf16.msra.mxu0 0
        %969 = vmatprep.subr.bf16.mxu0 0
        %970 = vmatpush1.bf16.msra.mxu0 0
        %971 = vmatprep.subr.bf16.mxu0 0
        %972 = vmatpush1.bf16.msra.mxu0 0
        %973 = vmatprep.subr.bf16.mxu0 0
        %974 = vmatpush1.bf16.msra.mxu0 0
        %975 = vmatprep.mubr.bf16.mxu0 0
        %976 = vmatmul.mubr.bf16.gmra.mrb[0].mxu0 %v938
        %v977 = vpop.f32.mrb[0].mxu0
        %v978 = vadd.f32 0.0, %v977
        %v979 = vpop.f32.mrb[0].mxu0
        %v980 = vpop.f32.mrb[0].mxu0
        %v981 = vpop.f32.mrb[0].mxu0
        %982 = vdwg.mxu0
        %v983 = vpack.c.bf16 %v978, %v978
        %v985 = vunpack.c.l.b16 %v983
        %v986 = vpack.c.b16 %v985, %v985
        %987 = vrot.lane.b32.xlu0 %v986, 24
        %v988 = vpop.permute.xlu0 %987
        %vm990 = vcmask 257216
        %991 = vst.msk [vmem:[#allocation2] sm:$0xf] %vm990, %v988
        %v992 = vld [vmem:[#allocation2] sm:$0xf]
        %v993 = vld [vmem:[%s4] sm:$0xf]
        %v994 = vld [vmem:[%s4 + $0x4] sm:$0xf]
        %v995 = vld [vmem:[%s4 + $0x8] sm:$0xf]
        %v996 = vld [vmem:[%s4 + $0xc] sm:$0xf]
        %v997 = vld [vmem:[%s5] sm:$0x1]
        %v999 = vlaneseq
        %v1000 = vshrl.u32 %v999, 7
        %v1001 = vsub.s32 0, %v1000
        %v1002 = vrot.slane %v997, %v1001
        %v1008 = vunpack.c.l.b16 %v993
        %v1009 = vunpack.c.l.b16 %v994
        %v1010 = vunpack.c.l.b16 %v995
        %v1011 = vunpack.c.l.b16 %v996
        %v1012 = vpack.c.b16 %v1009, %v1008
        %v1013 = vpack.c.b16 %v1011, %v1010
        %v1017 = vsel %vm428, %v992, 0
        %1019 = vmatprep.subr.bf16.mxu0 0
        %1020 = vmatpush1.bf16.msra.mxu0 %v1012
        %1021 = vmatprep.subr.bf16.mxu0 0
        %1022 = vmatpush1.bf16.msra.mxu0 %v1013
        %1023 = vmatprep.subr.bf16.mxu0 0
        %1024 = vmatpush1.bf16.msra.mxu0 0
        %1025 = vmatprep.subr.bf16.mxu0 0
        %1026 = vmatpush1.bf16.msra.mxu0 0
        %1027 = vmatprep.subr.bf16.mxu0 0
        %1028 = vmatpush1.bf16.msra.mxu0 0
        %1029 = vmatprep.subr.bf16.mxu0 0
        %1030 = vmatpush1.bf16.msra.mxu0 0
        %1031 = vmatprep.subr.bf16.mxu0 0
        %1032 = vmatpush1.bf16.msra.mxu0 0
        %1033 = vmatprep.subr.bf16.mxu0 0
        %1034 = vmatpush1.bf16.msra.mxu0 0
        %1035 = vmatprep.subr.bf16.mxu0 0
        %1036 = vmatpush1.bf16.msra.mxu0 0
        %1037 = vmatprep.subr.bf16.mxu0 0
        %1038 = vmatpush1.bf16.msra.mxu0 0
        %1039 = vmatprep.subr.bf16.mxu0 0
        %1040 = vmatpush1.bf16.msra.mxu0 0
        %1041 = vmatprep.subr.bf16.mxu0 0
        %1042 = vmatpush1.bf16.msra.mxu0 0
        %1043 = vmatprep.subr.bf16.mxu0 0
        %1044 = vmatpush1.bf16.msra.mxu0 0
        %1045 = vmatprep.subr.bf16.mxu0 0
        %1046 = vmatpush1.bf16.msra.mxu0 0
        %1047 = vmatprep.subr.bf16.mxu0 0
        %1048 = vmatpush1.bf16.msra.mxu0 0
        %1049 = vmatprep.subr.bf16.mxu0 0
        %1050 = vmatpush1.bf16.msra.mxu0 0
        %1051 = vmatprep.mubr.bf16.mxu0 0
        %1052 = vmatmul.mubr.bf16.gmra.mrb[0].mxu0 %v1017
        %v1053 = vpop.f32.mrb[0].mxu0
        %v1054 = vadd.f32 %v1002, %v1053
        %v1055 = vpop.f32.mrb[0].mxu0
        %v1056 = vpop.f32.mrb[0].mxu0
        %v1057 = vpop.f32.mrb[0].mxu0
        %1058 = vdwg.mxu0
        %v1059 = vadd.f32 %v425, %v1054
        %v1060 = vld [vmem:[%s6] sm:$0x1]
        %v1061 = vld [vmem:[%s7] sm:$0x1]
        %v1062 = vsel %vm428, %v1059, 0.0
        %1063 = vadd.xlane.f32.xlu0 %v1062
        %v1064 = vpop.xlane.xlu0 %1063
        %v1065 = vmul.f32 %v1064, %v432
        %v1066 = vsub.f32 %v1059, %v1065
        %v1067 = vmul.f32 %v1066, %v1066
        %v1068 = vsel %vm428, %v1067, 0.0
        %1069 = vadd.xlane.f32.xlu0 %v1068
        %v1070 = vpop.xlane.xlu0 %1069
        %v1071 = vmul.f32 %v1070, %v432
        %v1072 = vadd.f32 %v1071, 1e-06
        %v1073 = vrsqrt.pop %v1072
        %v1074 = vmul.f32 %v1066, %v1073
        %v1076 = vlaneseq
        %v1077 = vshrl.u32 %v1076, 7
        %v1078 = vsub.s32 0, %v1077
        %v1079 = vrot.slane %v1060, %v1078
        %v1081 = vmul.f32 %v1074, %v1079
        %v1083 = vlaneseq
        %v1084 = vshrl.u32 %v1083, 7
        %v1085 = vsub.s32 0, %v1084
        %v1086 = vrot.slane %v1061, %v1085
        %v1088 = vadd.f32 %v1081, %v1086
        %v1089 = vpack.c.bf16 %v1088, %v1088
        %v1090 = vld [vmem:[#allocation3] sm:$0xf]
        %v1091 = vld [vmem:[#allocation3 + $0x4] sm:$0xf]
        %v1092 = vld [vmem:[#allocation3 + $0x8] sm:$0xf]
        %v1093 = vld [vmem:[#allocation3 + $0xc] sm:$0xf]
        %v1094 = vld [vmem:[%s9] sm:$0x1]
        %v1096 = vlaneseq
        %v1097 = vshrl.u32 %v1096, 7
        %v1098 = vsub.s32 0, %v1097
        %v1099 = vrot.slane %v1094, %v1098
        %v1105 = vunpack.c.l.b16 %v1090
        %v1106 = vunpack.c.l.b16 %v1091
        %v1107 = vunpack.c.l.b16 %v1092
        %v1108 = vunpack.c.l.b16 %v1093
        %v1109 = vpack.c.b16 %v1106, %v1105
        %v1110 = vpack.c.b16 %v1108, %v1107
        %v1114 = vsel %vm428, %v1089, 0
        %1116 = vmatprep.subr.bf16.mxu0 0
        %1117 = vmatpush1.bf16.msra.mxu0 %v1109
        %1118 = vmatprep.subr.bf16.mxu0 0
        %1119 = vmatpush1.bf16.msra.mxu0 %v1110
        %1120 = vmatprep.subr.bf16.mxu0 0
        %1121 = vmatpush1.bf16.msra.mxu0 0
        %1122 = vmatprep.subr.bf16.mxu0 0
        %1123 = vmatpush1.bf16.msra.mxu0 0
        %1124 = vmatprep.subr.bf16.mxu0 0
        %1125 = vmatpush1.bf16.msra.mxu0 0
        %1126 = vmatprep.subr.bf16.mxu0 0
        %1127 = vmatpush1.bf16.msra.mxu0 0
        %1128 = vmatprep.subr.bf16.mxu0 0
        %1129 = vmatpush1.bf16.msra.mxu0 0
        %1130 = vmatprep.subr.bf16.mxu0 0
        %1131 = vmatpush1.bf16.msra.mxu0 0
        %1132 = vmatprep.subr.bf16.mxu0 0
        %1133 = vmatpush1.bf16.msra.mxu0 0
        %1134 = vmatprep.subr.bf16.mxu0 0
        %1135 = vmatpush1.bf16.msra.mxu0 0
        %1136 = vmatprep.subr.bf16.mxu0 0
        %1137 = vmatpush1.bf16.msra.mxu0 0
        %1138 = vmatprep.subr.bf16.mxu0 0
        %1139 = vmatpush1.bf16.msra.mxu0 0
        %1140 = vmatprep.subr.bf16.mxu0 0
        %1141 = vmatpush1.bf16.msra.mxu0 0
        %1142 = vmatprep.subr.bf16.mxu0 0
        %1143 = vmatpush1.bf16.msra.mxu0 0
        %1144 = vmatprep.subr.bf16.mxu0 0
        %1145 = vmatpush1.bf16.msra.mxu0 0
        %1146 = vmatprep.subr.bf16.mxu0 0
        %1147 = vmatpush1.bf16.msra.mxu0 0
        %1148 = vmatprep.mubr.bf16.mxu0 0
        %1149 = vmatmul.mubr.bf16.gmra.mrb[0].mxu0 %v1114
        %v1150 = vpop.f32.mrb[0].mxu0
        %v1151 = vadd.f32 %v1099, %v1150
        %v1152 = vpop.f32.mrb[0].mxu0
        %v1153 = vpop.f32.mrb[0].mxu0
        %v1154 = vpop.f32.mrb[0].mxu0
        %1155 = vdwg.mxu0
        %v1156 = vmul.f32 %v1151, 0.5
        %v1157 = vmul.f32 %v1151, 0.70710677
        %v1158 = verf.f32.pop %v1157
        %v1159 = vadd.f32 %v1158, 1.0
        %v1160 = vmul.f32 %v1156, %v1159
        %v1161 = vpack.c.bf16 %v1160, %v1160
        %v1162 = vld [vmem:[%s10] sm:$0xf]
        %v1163 = vld [vmem:[%s10 + $0x4] sm:$0xf]
        %v1164 = vld [vmem:[%s10 + $0x8] sm:$0xf]
        %v1165 = vld [vmem:[%s10 + $0xc] sm:$0xf]
        %v1166 = vld [vmem:[%s10 + $0x10] sm:$0xf]
        %v1167 = vld [vmem:[%s10 + $0x14] sm:$0xf]
        %v1168 = vld [vmem:[%s10 + $0x18] sm:$0xf]
        %v1169 = vld [vmem:[%s10 + $0x1c] sm:$0xf]
        %v1170 = vld [vmem:[%s11] sm:$0x1]
        %v1172 = vlaneseq
        %v1173 = vshrl.u32 %v1172, 7
        %v1174 = vsub.s32 0, %v1173
        %v1175 = vrot.slane %v1170, %v1174
        %v1185 = vunpack.c.l.b16 %v1162
        %v1186 = vunpack.c.l.b16 %v1163
        %v1187 = vunpack.c.l.b16 %v1164
        %v1188 = vunpack.c.l.b16 %v1165
        %v1189 = vunpack.c.l.b16 %v1166
        %v1190 = vunpack.c.l.b16 %v1167
        %v1191 = vunpack.c.l.b16 %v1168
        %v1192 = vunpack.c.l.b16 %v1169
        %v1193 = vpack.c.b16 %v1186, %v1185
        %v1194 = vpack.c.b16 %v1188, %v1187
        %v1195 = vpack.c.b16 %v1190, %v1189
        %v1196 = vpack.c.b16 %v1192, %v1191
        %vm1201 = vcmask 523264
        %v1203 = vsel %vm1201, %v1161, 0
        %1205 = vmatprep.subr.bf16.mxu0 0
        %1206 = vmatpush1.bf16.msra.mxu0 %v1193
        %1207 = vmatprep.subr.bf16.mxu0 0
        %1208 = vmatpush1.bf16.msra.mxu0 %v1194
        %1209 = vmatprep.subr.bf16.mxu0 0
        %1210 = vmatpush1.bf16.msra.mxu0 %v1195
        %1211 = vmatprep.subr.bf16.mxu0 0
        %1212 = vmatpush1.bf16.msra.mxu0 %v1196
        %1213 = vmatprep.subr.bf16.mxu0 0
        %1214 = vmatpush1.bf16.msra.mxu0 0
        %1215 = vmatprep.subr.bf16.mxu0 0
        %1216 = vmatpush1.bf16.msra.mxu0 0
        %1217 = vmatprep.subr.bf16.mxu0 0
        %1218 = vmatpush1.bf16.msra.mxu0 0
        %1219 = vmatprep.subr.bf16.mxu0 0
        %1220 = vmatpush1.bf16.msra.mxu0 0
        %1221 = vmatprep.subr.bf16.mxu0 0
        %1222 = vmatpush1.bf16.msra.mxu0 0
        %1223 = vmatprep.subr.bf16.mxu0 0
        %1224 = vmatpush1.bf16.msra.mxu0 0
        %1225 = vmatprep.subr.bf16.mxu0 0
        %1226 = vmatpush1.bf16.msra.mxu0 0
        %1227 = vmatprep.subr.bf16.mxu0 0
        %1228 = vmatpush1.bf16.msra.mxu0 0
        %1229 = vmatprep.subr.bf16.mxu0 0
        %1230 = vmatpush1.bf16.msra.mxu0 0
        %1231 = vmatprep.subr.bf16.mxu0 0
        %1232 = vmatpush1.bf16.msra.mxu0 0
        %1233 = vmatprep.subr.bf16.mxu0 0
        %1234 = vmatpush1.bf16.msra.mxu0 0
        %1235 = vmatprep.subr.bf16.mxu0 0
        %1236 = vmatpush1.bf16.msra.mxu0 0
        %1237 = vmatprep.mubr.bf16.mxu0 0
        %1238 = vmatmul.mubr.bf16.gmra.mrb[0].mxu0 %v1203
        %v1239 = vpop.f32.mrb[0].mxu0
        %v1240 = vadd.f32 %v1175, %v1239
        %v1241 = vpop.f32.mrb[0].mxu0
        %v1242 = vpop.f32.mrb[0].mxu0
        %v1243 = vpop.f32.mrb[0].mxu0
        %1244 = vdwg.mxu0
        %v1245 = vadd.f32 %v1059, %v1240
        %1246 = vst.msk [vmem:[%s419] sm:$0xff] %vm428, %v1245
        %s1247 = sand.u32 %s292, 1
        %s1248 = scalar_lea.sflag [#allocation5], %s1247
        %s1249 = sand.u32 %s292, 1
        %s1250 = smul.addr %s1249, 8
        %s1251 = scalar_lea.vmem [#allocation6], %s1250
        // Predicated region
        $region73: #{tpu_custom_call.1} parent=67 // pred_check
          %p1252 = pneg %p302
        $region74: #{tpu_custom_call.1} parent=67 // pred_check_branch
          %1254 = sbr.rel (%p1252) target = $region76
        $region75: #{tpu_custom_call.1} parent=67 // pred_region
          %s1256 = ssub.s32 128, 128
          %1257 = vsyncadd %s1248, %s1256
          %s1258 = smul.addr %s27, 128
          %s1259 = scalar_lea.hbm %s12, %s1258
          %s1261 = sshll.u32 %s1251, 4
          %s1262 = int_to_ptr.vmem [resolvable:$true] %s1261
          %1264 = dma.vmem_to_hbm [thread:$0]  %s1262, 128, %s1259, %s1248
        $region76: #{tpu_custom_call.1} parent=67 // pred_fallthru
          _
      $region68: #{tpu_custom_call.1} parent=5 // pred_fallthru
        _
      %p1265 = scmp.le.s32.totalorder 2, %s22
      // Predicated region
      $region77: #{tpu_custom_call.1} parent=5 // pred_check
        %p1266 = pneg %p1265
      $region78: #{tpu_custom_call.1} parent=5 // pred_check_branch
        %1268 = sbr.rel (%p1266) target = $region80
      $region79: #{tpu_custom_call.1} parent=5 // pred_region
        %s1269 = ssub.s32 %s22, 2
        // Predicated region
        $region81: #{tpu_custom_call.1} parent=79 // pred_check
          %p1270 = pneg %p308
        $region82: #{tpu_custom_call.1} parent=79 // pred_check_branch
          %1272 = sbr.rel (%p1270) target = $region84
        $region83: #{tpu_custom_call.1} parent=79 // pred_region
          %s1273 = sand.u32 %s293, 1
          %s1274 = scalar_lea.sflag [#allocation5], %s1273
          %s1275 = sand.u32 %s293, 1
          %s1276 = smul.addr %s1275, 8
          %s1277 = scalar_lea.vmem [#allocation6], %s1276
          %1278 = dma.done %s1274, 128
        $region84: #{tpu_custom_call.1} parent=79 // pred_fallthru
          _
      $region80: #{tpu_custom_call.1} parent=5 // pred_fallthru
        _
    $region6: #{tpu_custom_call.1} parent=1 // loop_footer
      %s26 = sadd.s32 1, %s22
    $region7: #{tpu_custom_call.1} parent=1 // loop_footer_branch
      %21 = sbr.rel target = $region3
    $region8: #{tpu_custom_call.1} parent=1 // loop_exit
      _
    %1279 = vsyncpa [#allocation4], 1
    %s1280 = scalar_lea.sflag [#allocation4], 1
    %1281 = vsyncpa %s1280, 1
    %1282 = vsyncpa [#allocation5], 1
    %s1283 = scalar_lea.sflag [#allocation5], 1
    %1284 = vsyncpa %s1283, 1

</llo_original>
